<compile_context>
chip_gen: v5e
topology: v5e:2x2
jax: 0.10.0
libtpu: 0.0.40
codegen_flags: <defaults>
</compile_context>

<pallas_src>
import functools

import numpy as np

import jax
import jax.numpy as jnp
from jax.experimental import pallas as pl
from jax.experimental.pallas import tpu as pltpu  # noqa: F401  (TPU backend)

EPS = 1e-5


# ------------------------------ fused kernel -------------------------------

def _bn_relu_cols(y, ch_sum_rows, r, rt, gamma, beta, inv_count):
    """Train-mode BatchNorm + ReLU on (N, H*W*C) data, channel minor in columns.

    ch_sum_rows: (N, C) per-sample channel sums (computed from the layer INPUT
    via the premultiplied W@R matrix, so it does not depend on y).
    r: (H*W*C, C) sums columns per channel; rt = r.T broadcasts per-channel
    values back to columns.  Stats over (N, H, W); biased variance; eps=1e-5.
    """
    mean = jnp.sum(ch_sum_rows, axis=0, keepdims=True) * inv_count       # (1, C)
    sumsq = jnp.sum(jnp.dot(y * y, r, preferred_element_type=jnp.float32),
                    axis=0, keepdims=True)                               # (1, C)
    var = sumsq * inv_count - mean * mean
    scale = gamma * jax.lax.rsqrt(var + EPS)                             # (1, C)
    shift = beta - mean * scale                                          # (1, C)
    # One broadcast matmul for both scale and shift: (2, C) @ (C, HWC).
    sb = jnp.dot(jnp.concatenate([scale, shift], axis=0), rt,
                 preferred_element_type=jnp.float32)                     # (2, HWC)
    return jnp.maximum(y * sb[0:1, :] + sb[1:2, :], 0.0)


def _generator_kernel(z_ref, w1m_ref, pr1_ref, m2_ref, pr2_ref, m3_ref,
                      r1_ref, r1t_ref, r2_ref, r2t_ref,
                      g1_ref, b1_ref, g2_ref, b2_ref,
                      o_ref, *, inv_count1, inv_count2):
    z = z_ref[...]
    # Layer 1: ConvT(nz, c1, k4, s1, p0) on a 1x1 input == matmul.  (N, 16*c1)
    y1 = jnp.dot(z, w1m_ref[...], preferred_element_type=jnp.float32)
    cs1 = jnp.dot(z, pr1_ref[...], preferred_element_type=jnp.float32)   # (N, c1)
    a1 = _bn_relu_cols(y1, cs1, r1_ref[...], r1t_ref[...],
                       g1_ref[...], b1_ref[...], inv_count1)
    # Layer 2: ConvT(c1, c2, k4, s2, p1) as a dense matrix.           (N, 64*c2)
    y2 = jnp.dot(a1, m2_ref[...], preferred_element_type=jnp.float32)
    cs2 = jnp.dot(a1, pr2_ref[...], preferred_element_type=jnp.float32)  # (N, c2)
    a2 = _bn_relu_cols(y2, cs2, r2_ref[...], r2t_ref[...],
                       g2_ref[...], b2_ref[...], inv_count2)
    # Layer 3: ConvT(c2, nc, k4, s2, p1) + Tanh; output columns ordered
    # (c, h, w) so the host-side reshape yields NCHW directly.        (N, nc*256)
    o_ref[...] = jnp.tanh(jnp.dot(a2, m3_ref[...],
                                  preferred_element_type=jnp.float32))


# ----------------------- weight-only preprocessing (host, once) -------------

def _convT_as_matrix_np(w, H, W, stride, pad, channels_first_out=False):
    """Fold ConvTranspose2d into a dense matrix acting on per-sample rows.

    w: ConvTranspose2d weight (Cin, Cout, kH, kW), numpy.
    Returns M of shape (H*W*Cin, Ho*Wo*Cout) with input columns ordered
    (i, j, ci) and output columns ordered (ho, wo, co) -- or (co, ho, wo) if
    channels_first_out -- such that out_flat = act_flat @ M.
    ConvT semantics: out[ho,wo] += in[i,j] * w[.,.,kh,kw] at ho = i*s - p + kh.
    """
    w = np.asarray(w, dtype=np.float32)
    Cin, Cout, k, _ = w.shape
    Ho = (H - 1) * stride - 2 * pad + k
    Wo = (W - 1) * stride - 2 * pad + k
    kh = np.arange(Ho)[None, :] - stride * np.arange(H)[:, None] + pad   # (H, Ho)
    kw = np.arange(Wo)[None, :] - stride * np.arange(W)[:, None] + pad   # (W, Wo)
    vh = (kh >= 0) & (kh < k)
    vw = (kw >= 0) & (kw < k)
    khc = np.clip(kh, 0, k - 1)
    kwc = np.clip(kw, 0, k - 1)
    # gather -> (Cin, Cout, H, Ho, W, Wo)
    g = w[:, :, khc[:, :, None, None], kwc[None, None, :, :]]
    mask = (vh[:, :, None, None] & vw[None, None, :, :]).astype(np.float32)
    g = g * mask[None, None]
    if channels_first_out:
        m = np.transpose(g, (2, 4, 0, 1, 3, 5))      # (H, W, Cin, Cout, Ho, Wo)
        m = m.reshape(H * W * Cin, Cout * Ho * Wo)
    else:
        m = np.transpose(g, (2, 4, 0, 3, 5, 1))      # (H, W, Cin, Ho, Wo, Cout)
        m = m.reshape(H * W * Cin, Ho * Wo * Cout)
    return np.ascontiguousarray(m), Ho, Wo


def prepare_generator(params):
    """One-time, weight-only folding.  Call once; reuse the result every forward."""
    w1, w2, w3 = (np.asarray(params["w1"]), np.asarray(params["w2"]),
                  np.asarray(params["w3"]))
    c1, c2 = w1.shape[1], w2.shape[1]

    w1m, h1, _ = _convT_as_matrix_np(w1, 1, 1, 1, 0)                     # (nz, 16*c1)
    m2, h2, _ = _convT_as_matrix_np(w2, h1, h1, 2, 1)                    # (16*c1, 64*c2)
    m3, _, _ = _convT_as_matrix_np(w3, h2, h2, 2, 1,
                                   channels_first_out=True)             # (64*c2, nc*256)

    # Channel-sum / channel-broadcast matrices for in-kernel BatchNorm.
    r1 = np.tile(np.eye(c1, dtype=np.float32), (h1 * h1, 1))             # (16*c1, c1)
    r2 = np.tile(np.eye(c2, dtype=np.float32), (h2 * h2, 1))             # (64*c2, c2)
    # Premultiplied channel-sum matrices: channel sums come straight from the
    # layer INPUT, off the BN critical path.
    pr1 = w1m @ r1                                                       # (nz, c1)
    pr2 = m2 @ r2                                                        # (16*c1, c2)

    return {
        "w1m": jnp.asarray(w1m), "m2": jnp.asarray(m2), "m3": jnp.asarray(m3),
        "pr1": jnp.asarray(pr1), "pr2": jnp.asarray(pr2),
        "r1": jnp.asarray(r1), "r1t": jnp.asarray(np.ascontiguousarray(r1.T)),
        "r2": jnp.asarray(r2), "r2t": jnp.asarray(np.ascontiguousarray(r2.T)),
        "g1": jnp.asarray(params["g1"]), "b1": jnp.asarray(params["b1"]),
        "g2": jnp.asarray(params["g2"]), "b2": jnp.asarray(params["b2"]),
    }


# ------------------------------ Generator ----------------------------------

@jax.jit
def generator_forward(z, prep):
    """z: (N, nz, 1, 1) NCHW.  prep: output of prepare_generator(params).
    Returns (N, nc, imgsize, imgsize) NCHW."""
    w1m, pr1 = prep["w1m"], prep["pr1"]
    m2, pr2, m3 = prep["m2"], prep["pr2"], prep["m3"]
    r1, r1t, r2, r2t = prep["r1"], prep["r1t"], prep["r2"], prep["r2t"]
    g1, b1, g2, b2 = prep["g1"], prep["b1"], prep["g2"], prep["b2"]

    N, nz = z.shape[0], z.shape[1]
    c1, c2 = g1.shape[1], g2.shape[1]
    hw1 = w1m.shape[1] // c1                 # h1*h1 (= 16)
    hw2 = m2.shape[1] // c2                  # h2*h2 (= 64)
    h3 = 2 * int(round(hw2 ** 0.5))          # output spatial size (= 16)
    out_cols = m3.shape[1]
    nc = out_cols // (h3 * h3)

    z2 = z.reshape(N, nz)
    operands = (z2, w1m, pr1, m2, pr2, m3, r1, r1t, r2, r2t, g1, b1, g2, b2)

    flops = int(2 * N * (nz * w1m.shape[1]              # layer 1
                         + w1m.shape[1] * m2.shape[1]   # layer 2
                         + m2.shape[1] * m3.shape[1]    # layer 3
                         + nz * c1 + w1m.shape[1] * c2  # channel sums
                         + w1m.shape[1] * c1 + m2.shape[1] * c2   # sum of squares
                         + 2 * (w1m.shape[1] + m2.shape[1])))     # scale/shift bcast
    bytes_accessed = int(4 * (sum(int(np.prod(op.shape)) for op in operands)
                              + N * out_cols))
    transcendentals = int(N * out_cols + c1 + c2)        # tanh + rsqrt

    kernel = functools.partial(_generator_kernel,
                               inv_count1=1.0 / (N * hw1),
                               inv_count2=1.0 / (N * hw2))

    out = pl.pallas_call(
        kernel,
        out_shape=jax.ShapeDtypeStruct((N, out_cols), jnp.float32),
        cost_estimate=pl.CostEstimate(flops=flops,
                                      transcendentals=transcendentals,
                                      bytes_accessed=bytes_accessed),
    )(*operands)

    # Columns are already ordered (c, h, w) -> plain reshape gives NCHW.
    return out.reshape(N, nc, h3, h3)


def init_params(key, nz=8, ngf=8, nc=3, imgsize=16):
    assert imgsize % 16 == 0
    mult = imgsize // 8                           # = 2 for imgsize=16
    c1 = ngf * mult                               # 16
    c2 = ngf                                      # 8
    ks = jax.random.split(key, 7)
    return {
        # ConvTranspose2d weights: (C_in, C_out, kH, kW), DCGAN-style init.
        "w1": 0.02 * jax.random.normal(ks[0], (nz, c1, 4, 4), jnp.float32),
        "w2": 0.02 * jax.random.normal(ks[1], (c1, c2, 4, 4), jnp.float32),
        "w3": 0.02 * jax.random.normal(ks[2], (c2, nc, 4, 4), jnp.float32),
        # BatchNorm affine params, kept (1, C).
        "g1": 1.0 + 0.1 * jax.random.normal(ks[3], (1, c1), jnp.float32),
        "b1": 0.1 * jax.random.normal(ks[4], (1, c1), jnp.float32),
        "g2": 1.0 + 0.1 * jax.random.normal(ks[5], (1, c2), jnp.float32),
        "b2": 0.1 * jax.random.normal(ks[6], (1, c2), jnp.float32),
    }
    # TODO(synk): BatchNorm running-stat updates and the nn.parallel
    # data_parallel branch are training / device-placement side effects with no
    # bearing on forward outputs; not modeled.


# ------------------------- plain-JAX reference check ------------------------

def _reference_forward(z, params):
    """Independent XLA reference (ConvT == lhs-dilated conv with flipped kernel)."""
    def convT(x, w, stride, pad):
        k = w.shape[2]
        kern = jnp.transpose(jnp.flip(w, (2, 3)), (1, 0, 2, 3))   # OIHW
        return jax.lax.conv_general_dilated(
            x, kern, window_strides=(1, 1),
            padding=((k - 1 - pad,) * 2, (k - 1 - pad,) * 2),
            lhs_dilation=(stride, stride),
            dimension_numbers=("NCHW", "OIHW", "NCHW"))

    def bn_relu(x, gamma, beta):
        mean = jnp.mean(x, axis=(0, 2, 3), keepdims=True)
        var = jnp.mean(jnp.square(x - mean), axis=(0, 2, 3), keepdims=True)
        xhat = (x - mean) / jnp.sqrt(var + EPS)
        return jnp.maximum(xhat * gamma.reshape(1, -1, 1, 1)
                           + beta.reshape(1, -1, 1, 1), 0.0)

    a1 = bn_relu(convT(z, params["w1"], 1, 0), params["g1"], params["b1"])
    a2 = bn_relu(convT(a1, params["w2"], 2, 1), params["g2"], params["b2"])
    return jnp.tanh(convT(a2, params["w3"], 2, 1))


if __name__ == "__main__":
    key = jax.random.PRNGKey(0)
    kp, kz = jax.random.split(key)
    nz, ngf, nc, imgsize, batch = 8, 8, 3, 16, 2

    params = init_params(kp, nz=nz, ngf=ngf, nc=nc, imgsize=imgsize)
    z = jax.random.normal(kz, (batch, nz, 1, 1), jnp.float32)

    # One-time weight folding (hoisted out of the per-call path).
    prep = prepare_generator(params)

    out = jax.block_until_ready(generator_forward(z, prep))

    assert out.shape == (batch, nc, imgsize, imgsize), out.shape
    assert out.dtype == jnp.float32
    assert bool(jnp.all(jnp.isfinite(out)))
    assert bool(jnp.all(jnp.abs(out) <= 1.0))      # tanh range

    ref = _reference_forward(z, params)
    max_err = float(jnp.max(jnp.abs(out - ref)))
    assert bool(jnp.allclose(out, ref, atol=1e-4, rtol=1e-4)), max_err

    print("KERNEL_OK")
</pallas_src>

<mosaic_0001>
module attributes {stable_mosaic.version = 11 : i64} {
  func.func @_generator_kernel(%arg0: memref<2x8xf32, #tpu.memory_space<vmem>>, %arg1: memref<8x256xf32, #tpu.memory_space<vmem>>, %arg2: memref<8x16xf32, #tpu.memory_space<vmem>>, %arg3: memref<256x512xf32, #tpu.memory_space<vmem>>, %arg4: memref<256x8xf32, #tpu.memory_space<vmem>>, %arg5: memref<512x768xf32, #tpu.memory_space<vmem>>, %arg6: memref<256x16xf32, #tpu.memory_space<vmem>>, %arg7: memref<16x256xf32, #tpu.memory_space<vmem>>, %arg8: memref<512x8xf32, #tpu.memory_space<vmem>>, %arg9: memref<8x512xf32, #tpu.memory_space<vmem>>, %arg10: memref<1x16xf32, #tpu.memory_space<vmem>>, %arg11: memref<1x16xf32, #tpu.memory_space<vmem>>, %arg12: memref<1x8xf32, #tpu.memory_space<vmem>>, %arg13: memref<1x8xf32, #tpu.memory_space<vmem>>, %arg14: memref<2x768xf32, #tpu.memory_space<vmem>>) attributes {dimension_semantics = [], scalar_prefetch = 0 : i64, scratch_operands = 0 : i64, tpu.core_type = #tpu.core_type<tc>} {
    %c0 = arith.constant 0 : index
    %c0_0 = arith.constant 0 : index
    %0 = vector.load %arg0[%c0, %c0_0] : memref<2x8xf32, #tpu.memory_space<vmem>>, vector<2x8xf32>
    %c0_1 = arith.constant 0 : index
    %c0_2 = arith.constant 0 : index
    %1 = vector.load %arg1[%c0_1, %c0_2] : memref<8x256xf32, #tpu.memory_space<vmem>>, vector<8x256xf32>
    %cst = arith.constant dense<0.000000e+00> : vector<2x256xf32>
    %2 = tpu.matmul %0, %1, %cst {dimension_numbers = #tpu.dot_dimension_numbers<[1], [0], [0], [1], [0, 0, 1, 1], [], []>} : vector<2x8xf32>, vector<8x256xf32>, vector<2x256xf32> -> vector<2x256xf32>
    %c0_3 = arith.constant 0 : index
    %c0_4 = arith.constant 0 : index
    %3 = vector.load %arg2[%c0_3, %c0_4] : memref<8x16xf32, #tpu.memory_space<vmem>>, vector<8x16xf32>
    %cst_5 = arith.constant dense<0.000000e+00> : vector<2x16xf32>
    %4 = tpu.matmul %0, %3, %cst_5 {dimension_numbers = #tpu.dot_dimension_numbers<[1], [0], [0], [1], [0, 0, 1, 1], [], []>} : vector<2x8xf32>, vector<8x16xf32>, vector<2x16xf32> -> vector<2x16xf32>
    %c0_6 = arith.constant 0 : index
    %c0_7 = arith.constant 0 : index
    %5 = vector.load %arg6[%c0_6, %c0_7] : memref<256x16xf32, #tpu.memory_space<vmem>>, vector<256x16xf32>
    %c0_8 = arith.constant 0 : index
    %c0_9 = arith.constant 0 : index
    %6 = vector.load %arg7[%c0_8, %c0_9] : memref<16x256xf32, #tpu.memory_space<vmem>>, vector<16x256xf32>
    %c0_10 = arith.constant 0 : index
    %c0_11 = arith.constant 0 : index
    %7 = vector.load %arg10[%c0_10, %c0_11] : memref<1x16xf32, #tpu.memory_space<vmem>>, vector<1x16xf32>
    %c0_12 = arith.constant 0 : index
    %c0_13 = arith.constant 0 : index
    %8 = vector.load %arg11[%c0_12, %c0_13] : memref<1x16xf32, #tpu.memory_space<vmem>>, vector<1x16xf32>
    %cst_14 = arith.constant dense<0.000000e+00> : vector<16xf32>
    %9 = vector.multi_reduction <add>, %4, %cst_14 [0] : vector<2x16xf32> to vector<16xf32>
    %10 = vector.shape_cast %9 : vector<16xf32> to vector<1x16xf32>
    %cst_15 = arith.constant 3.125000e-02 : f32
    %11 = vector.broadcast %cst_15 : f32 to vector<1x16xf32>
    %12 = arith.mulf %10, %11 : vector<1x16xf32>
    %13 = arith.mulf %2, %2 : vector<2x256xf32>
    %cst_16 = arith.constant dense<0.000000e+00> : vector<2x16xf32>
    %14 = tpu.matmul %13, %5, %cst_16 {dimension_numbers = #tpu.dot_dimension_numbers<[1], [0], [0], [1], [0, 0, 1, 1], [], []>} : vector<2x256xf32>, vector<256x16xf32>, vector<2x16xf32> -> vector<2x16xf32>
    %cst_17 = arith.constant dense<0.000000e+00> : vector<16xf32>
    %15 = vector.multi_reduction <add>, %14, %cst_17 [0] : vector<2x16xf32> to vector<16xf32>
    %16 = vector.shape_cast %15 : vector<16xf32> to vector<1x16xf32>
    %cst_18 = arith.constant 3.125000e-02 : f32
    %17 = vector.broadcast %cst_18 : f32 to vector<1x16xf32>
    %18 = arith.mulf %16, %17 : vector<1x16xf32>
    %19 = arith.mulf %12, %12 : vector<1x16xf32>
    %20 = arith.subf %18, %19 : vector<1x16xf32>
    %cst_19 = arith.constant 9.99999974E-6 : f32
    %21 = vector.broadcast %cst_19 : f32 to vector<1x16xf32>
    %22 = arith.addf %20, %21 : vector<1x16xf32>
    %23 = math.rsqrt %22 : vector<1x16xf32>
    %24 = arith.mulf %7, %23 : vector<1x16xf32>
    %25 = arith.mulf %12, %24 : vector<1x16xf32>
    %26 = arith.subf %8, %25 : vector<1x16xf32>
    %27 = tpu.concatenate %24, %26 in 0 : vector<1x16xf32>, vector<1x16xf32> -> vector<2x16xf32>
    %cst_20 = arith.constant dense<0.000000e+00> : vector<2x256xf32>
    %28 = tpu.matmul %27, %6, %cst_20 {dimension_numbers = #tpu.dot_dimension_numbers<[1], [0], [0], [1], [0, 0, 1, 1], [], []>} : vector<2x16xf32>, vector<16x256xf32>, vector<2x256xf32> -> vector<2x256xf32>
    %29 = vector.extract_strided_slice %28 {offsets = [0, 0], sizes = [1, 256], strides = [1, 1]} : vector<2x256xf32> to vector<1x256xf32>
    %30 = vector.broadcast %29 : vector<1x256xf32> to vector<2x256xf32>
    %31 = arith.mulf %2, %30 : vector<2x256xf32>
    %32 = vector.extract_strided_slice %28 {offsets = [1, 0], sizes = [1, 256], strides = [1, 1]} : vector<2x256xf32> to vector<1x256xf32>
    %33 = vector.broadcast %32 : vector<1x256xf32> to vector<2x256xf32>
    %34 = arith.addf %31, %33 : vector<2x256xf32>
    %cst_21 = arith.constant 0.000000e+00 : f32
    %35 = vector.broadcast %cst_21 : f32 to vector<2x256xf32>
    %36 = arith.maximumf %34, %35 : vector<2x256xf32>
    %c0_22 = arith.constant 0 : index
    %c0_23 = arith.constant 0 : index
    %37 = vector.load %arg3[%c0_22, %c0_23] : memref<256x512xf32, #tpu.memory_space<vmem>>, vector<256x512xf32>
    %cst_24 = arith.constant dense<0.000000e+00> : vector<2x512xf32>
    %38 = tpu.matmul %36, %37, %cst_24 {dimension_numbers = #tpu.dot_dimension_numbers<[1], [0], [0], [1], [0, 0, 1, 1], [], []>} : vector<2x256xf32>, vector<256x512xf32>, vector<2x512xf32> -> vector<2x512xf32>
    %c0_25 = arith.constant 0 : index
    %c0_26 = arith.constant 0 : index
    %39 = vector.load %arg4[%c0_25, %c0_26] : memref<256x8xf32, #tpu.memory_space<vmem>>, vector<256x8xf32>
    %cst_27 = arith.constant dense<0.000000e+00> : vector<2x8xf32>
    %40 = tpu.matmul %36, %39, %cst_27 {dimension_numbers = #tpu.dot_dimension_numbers<[1], [0], [0], [1], [0, 0, 1, 1], [], []>} : vector<2x256xf32>, vector<256x8xf32>, vector<2x8xf32> -> vector<2x8xf32>
    %c0_28 = arith.constant 0 : index
    %c0_29 = arith.constant 0 : index
    %41 = vector.load %arg8[%c0_28, %c0_29] : memref<512x8xf32, #tpu.memory_space<vmem>>, vector<512x8xf32>
    %c0_30 = arith.constant 0 : index
    %c0_31 = arith.constant 0 : index
    %42 = vector.load %arg9[%c0_30, %c0_31] : memref<8x512xf32, #tpu.memory_space<vmem>>, vector<8x512xf32>
    %c0_32 = arith.constant 0 : index
    %c0_33 = arith.constant 0 : index
    %43 = vector.load %arg12[%c0_32, %c0_33] : memref<1x8xf32, #tpu.memory_space<vmem>>, vector<1x8xf32>
    %c0_34 = arith.constant 0 : index
    %c0_35 = arith.constant 0 : index
    %44 = vector.load %arg13[%c0_34, %c0_35] : memref<1x8xf32, #tpu.memory_space<vmem>>, vector<1x8xf32>
    %cst_36 = arith.constant dense<0.000000e+00> : vector<8xf32>
    %45 = vector.multi_reduction <add>, %40, %cst_36 [0] : vector<2x8xf32> to vector<8xf32>
    %46 = vector.shape_cast %45 : vector<8xf32> to vector<1x8xf32>
    %cst_37 = arith.constant 7.812500e-03 : f32
    %47 = vector.broadcast %cst_37 : f32 to vector<1x8xf32>
    %48 = arith.mulf %46, %47 : vector<1x8xf32>
    %49 = arith.mulf %38, %38 : vector<2x512xf32>
    %cst_38 = arith.constant dense<0.000000e+00> : vector<2x8xf32>
    %50 = tpu.matmul %49, %41, %cst_38 {dimension_numbers = #tpu.dot_dimension_numbers<[1], [0], [0], [1], [0, 0, 1, 1], [], []>} : vector<2x512xf32>, vector<512x8xf32>, vector<2x8xf32> -> vector<2x8xf32>
    %cst_39 = arith.constant dense<0.000000e+00> : vector<8xf32>
    %51 = vector.multi_reduction <add>, %50, %cst_39 [0] : vector<2x8xf32> to vector<8xf32>
    %52 = vector.shape_cast %51 : vector<8xf32> to vector<1x8xf32>
    %cst_40 = arith.constant 7.812500e-03 : f32
    %53 = vector.broadcast %cst_40 : f32 to vector<1x8xf32>
    %54 = arith.mulf %52, %53 : vector<1x8xf32>
    %55 = arith.mulf %48, %48 : vector<1x8xf32>
    %56 = arith.subf %54, %55 : vector<1x8xf32>
    %cst_41 = arith.constant 9.99999974E-6 : f32
    %57 = vector.broadcast %cst_41 : f32 to vector<1x8xf32>
    %58 = arith.addf %56, %57 : vector<1x8xf32>
    %59 = math.rsqrt %58 : vector<1x8xf32>
    %60 = arith.mulf %43, %59 : vector<1x8xf32>
    %61 = arith.mulf %48, %60 : vector<1x8xf32>
    %62 = arith.subf %44, %61 : vector<1x8xf32>
    %63 = tpu.concatenate %60, %62 in 0 : vector<1x8xf32>, vector<1x8xf32> -> vector<2x8xf32>
    %cst_42 = arith.constant dense<0.000000e+00> : vector<2x512xf32>
    %64 = tpu.matmul %63, %42, %cst_42 {dimension_numbers = #tpu.dot_dimension_numbers<[1], [0], [0], [1], [0, 0, 1, 1], [], []>} : vector<2x8xf32>, vector<8x512xf32>, vector<2x512xf32> -> vector<2x512xf32>
    %65 = vector.extract_strided_slice %64 {offsets = [0, 0], sizes = [1, 512], strides = [1, 1]} : vector<2x512xf32> to vector<1x512xf32>
    %66 = vector.broadcast %65 : vector<1x512xf32> to vector<2x512xf32>
    %67 = arith.mulf %38, %66 : vector<2x512xf32>
    %68 = vector.extract_strided_slice %64 {offsets = [1, 0], sizes = [1, 512], strides = [1, 1]} : vector<2x512xf32> to vector<1x512xf32>
    %69 = vector.broadcast %68 : vector<1x512xf32> to vector<2x512xf32>
    %70 = arith.addf %67, %69 : vector<2x512xf32>
    %cst_43 = arith.constant 0.000000e+00 : f32
    %71 = vector.broadcast %cst_43 : f32 to vector<2x512xf32>
    %72 = arith.maximumf %70, %71 : vector<2x512xf32>
    %c0_44 = arith.constant 0 : index
    %c0_45 = arith.constant 0 : index
    %73 = vector.load %arg5[%c0_44, %c0_45] : memref<512x768xf32, #tpu.memory_space<vmem>>, vector<512x768xf32>
    %cst_46 = arith.constant dense<0.000000e+00> : vector<2x768xf32>
    %74 = tpu.matmul %72, %73, %cst_46 {dimension_numbers = #tpu.dot_dimension_numbers<[1], [0], [0], [1], [0, 0, 1, 1], [], []>} : vector<2x512xf32>, vector<512x768xf32>, vector<2x768xf32> -> vector<2x768xf32>
    %75 = math.tanh %74 : vector<2x768xf32>
    %c0_47 = arith.constant 0 : index
    %c0_48 = arith.constant 0 : index
    %76 = vector.load %arg14[%c0_47, %c0_48] : memref<2x768xf32, #tpu.memory_space<vmem>>, vector<2x768xf32>
    tpu.vector_store %arg14[%c0_47, %c0_48], %75 {strides = array<i32>} : memref<2x768xf32, #tpu.memory_space<vmem>>, vector<2x768xf32>,
    return
  }
}

</mosaic_0001>

<llo_original>
// kernel: generator_forward.1
$region0: #{generator_forward.1}
  #allocation0 [shape = 'u32[]', space=smem, size = 0x4, offset = 0x4, fixed_abs, tag = 'smem constant byte address 0x4 - core index']
  #allocation1 [shape = 'u32[72,128]{1,0:T(1,128)}', space=vmem, size = 0x9000, scoped, tag = 'internal scratch']
  %s0 = inlined_call_operand.hbm [shape: f32[2,8], index: 0, kind: input, shape index: {}]
  %s1 = inlined_call_operand.hbm [shape: f32[8,256], index: 1, kind: input, shape index: {}]
  %s2 = inlined_call_operand.hbm [shape: f32[8,16], index: 2, kind: input, shape index: {}]
  %s3 = inlined_call_operand.hbm [shape: f32[256,512], index: 3, kind: input, shape index: {}]
  %s4 = inlined_call_operand.vmem [shape: f32[256,8], index: 4, kind: input, shape index: {}]
  %s5 = inlined_call_operand.hbm [shape: f32[512,768], index: 5, kind: input, shape index: {}]
  %s6 = inlined_call_operand.vmem [shape: f32[256,16], index: 6, kind: input, shape index: {}]
  %s7 = inlined_call_operand.hbm [shape: f32[16,256], index: 7, kind: input, shape index: {}]
  %s8 = inlined_call_operand.vmem [shape: f32[512,8], index: 8, kind: input, shape index: {}]
  %s9 = inlined_call_operand.hbm [shape: f32[8,512], index: 9, kind: input, shape index: {}]
  %s10 = inlined_call_operand.hbm [shape: f32[1,16], index: 10, kind: input, shape index: {}]
  %s11 = inlined_call_operand.hbm [shape: f32[1,16], index: 11, kind: input, shape index: {}]
  %s12 = inlined_call_operand.hbm [shape: f32[1,8], index: 12, kind: input, shape index: {}]
  %s13 = inlined_call_operand.hbm [shape: f32[1,8], index: 13, kind: input, shape index: {}]
  %s14 = inlined_call_operand.vmem [shape: f32[2,768], index: 14, kind: output, shape index: {}]
  %s15 = sld [smem:[#allocation0]]
  $region110: #{generator_forward.1} parent=0
    _
  %s17 = ssub.s32 1, %s15
  %s18 = scalar_select 0, %s17, %s15
  $region1: #{generator_forward.1} parent=0
    #allocation2 [shape = 'u8[1024]{0}', space=vmem, size = 0x400, scoped, tag = 'input window, operand 0, single buffered']
    #allocation3 [shape = 's32[1]{0}', space=sflag, size = 0x4, scoped, tag = 'scoped memory for generator_forward.1']
    #allocation4 [shape = 'u8[8192]{0}', space=vmem, size = 0x2000, scoped, tag = 'input window, operand 1, single buffered']
    #allocation5 [shape = 's32[1]{0}', space=sflag, size = 0x4, scoped, tag = 'scoped memory for generator_forward.1']
    #allocation6 [shape = 'u8[4096]{0}', space=vmem, size = 0x1000, scoped, tag = 'input window, operand 2, single buffered']
    #allocation7 [shape = 'u8[524288]{0}', space=vmem, size = 0x80000, scoped, tag = 'input window, operand 3, single buffered']
    #allocation8 [shape = 's32[1]{0}', space=sflag, size = 0x4, scoped, tag = 'scoped memory for generator_forward.1']
    #allocation9 [shape = 'u8[1572864]{0}', space=vmem, size = 0x180000, scoped, tag = 'input window, operand 5, single buffered']
    #allocation10 [shape = 'u8[16384]{0}', space=vmem, size = 0x4000, scoped, tag = 'input window, operand 7, single buffered']
    #allocation11 [shape = 's32[1]{0}', space=sflag, size = 0x4, scoped, tag = 'scoped memory for generator_forward.1']
    #allocation12 [shape = 'u8[16384]{0}', space=vmem, size = 0x4000, scoped, tag = 'input window, operand 9, single buffered']
    #allocation13 [shape = 'u8[512]{0}', space=vmem, size = 0x400, scoped, tag = 'input window, operand 10, single buffered']
    #allocation14 [shape = 's32[1]{0}', space=sflag, size = 0x4, scoped, tag = 'scoped memory for generator_forward.1']
    #allocation15 [shape = 'u8[512]{0}', space=vmem, size = 0x400, scoped, tag = 'input window, operand 11, single buffered']
    #allocation16 [shape = 'u8[512]{0}', space=vmem, size = 0x400, scoped, tag = 'input window, operand 12, single buffered']
    #allocation17 [shape = 's32[1]{0}', space=sflag, size = 0x4, scoped, tag = 'scoped memory for generator_forward.1']
    #allocation18 [shape = 'u8[512]{0}', space=vmem, size = 0x400, scoped, tag = 'input window, operand 13, single buffered']
    %19 = vsyncpa [#allocation3], 0
    %20 = vsyncpa [#allocation5], 0
    %21 = vsyncpa [#allocation8], 0
    %22 = vsyncpa [#allocation11], 0
    %23 = vsyncpa [#allocation14], 0
    %24 = vsyncpa [#allocation17], 0
    // Predicated region
    $region2: #{generator_forward.1} parent=1 // pred_check
      _
    $region3: #{generator_forward.1} parent=1 // pred_check_branch
      %26 = sbr.rel (0) target = $region5
    $region4: #{generator_forward.1} parent=1 // pred_region
      %28 = vsyncadd [#allocation3], 0
      %s30 = sshll.u32 %s0, 4
      %s31 = int_to_ptr.hbm [resolvable:$true] %s30
      %s32 = sshll.u32 [#allocation2], 4
      %s33 = int_to_ptr.vmem [resolvable:$true] %s32
      %35 = dma.hbm_to_vmem [thread:$0]  %s31, 32, %s33, [#allocation3]
    $region5: #{generator_forward.1} parent=1 // pred_fallthru
      _
    // Predicated region
    $region6: #{generator_forward.1} parent=1 // pred_check
      _
    $region7: #{generator_forward.1} parent=1 // pred_check_branch
      %37 = sbr.rel (0) target = $region9
    $region8: #{generator_forward.1} parent=1 // pred_region
      %39 = vsyncadd [#allocation5], 0
      %s41 = sshll.u32 %s1, 4
      %s42 = int_to_ptr.hbm [resolvable:$true] %s41
      %s43 = sshll.u32 [#allocation4], 4
      %s44 = int_to_ptr.vmem [resolvable:$true] %s43
      %46 = dma.hbm_to_vmem [thread:$0]  %s42, 256, %s44, [#allocation5]
    $region9: #{generator_forward.1} parent=1 // pred_fallthru
      _
    // Predicated region
    $region10: #{generator_forward.1} parent=1 // pred_check
      _
    $region11: #{generator_forward.1} parent=1 // pred_check_branch
      %48 = sbr.rel (0) target = $region13
    $region12: #{generator_forward.1} parent=1 // pred_region
      %50 = vsyncadd [#allocation5], 0
      %s52 = sshll.u32 %s2, 4
      %s53 = int_to_ptr.hbm [resolvable:$true] %s52
      %s54 = sshll.u32 [#allocation6], 4
      %s55 = int_to_ptr.vmem [resolvable:$true] %s54
      %57 = dma.hbm_to_vmem [thread:$0]  %s53, 128, %s55, [#allocation5]
    $region13: #{generator_forward.1} parent=1 // pred_fallthru
      _
    // Predicated region
    $region14: #{generator_forward.1} parent=1 // pred_check
      _
    $region15: #{generator_forward.1} parent=1 // pred_check_branch
      %59 = sbr.rel (0) target = $region17
    $region16: #{generator_forward.1} parent=1 // pred_region
      %61 = vsyncadd [#allocation8], 0
      %s62 = sshll.u32 %s3, 4
      %s63 = int_to_ptr.hbm [resolvable:$true] %s62
      %s64 = sshll.u32 [#allocation7], 4
      %s65 = int_to_ptr.vmem [resolvable:$true] %s64
      %70 = dma.hbm_to_vmem [thread:$0]  %s63, 16384, %s65, [#allocation8], 512, 512, 32
    $region17: #{generator_forward.1} parent=1 // pred_fallthru
      _
    // Predicated region
    $region18: #{generator_forward.1} parent=1 // pred_check
      _
    $region19: #{generator_forward.1} parent=1 // pred_check_branch
      %72 = sbr.rel (0) target = $region21
    $region20: #{generator_forward.1} parent=1 // pred_region
      _
    $region21: #{generator_forward.1} parent=1 // pred_fallthru
      _
    // Predicated region
    $region22: #{generator_forward.1} parent=1 // pred_check
      _
    $region23: #{generator_forward.1} parent=1 // pred_check_branch
      %74 = sbr.rel (0) target = $region25
    $region24: #{generator_forward.1} parent=1 // pred_region
      %76 = vsyncadd [#allocation8], 0
      %s77 = sshll.u32 %s5, 4
      %s78 = int_to_ptr.hbm [resolvable:$true] %s77
      %s79 = sshll.u32 [#allocation9], 4
      %s80 = int_to_ptr.vmem [resolvable:$true] %s79
      %85 = dma.hbm_to_vmem [thread:$0]  %s78, 49152, %s80, [#allocation8], 768, 768, 48
    $region25: #{generator_forward.1} parent=1 // pred_fallthru
      _
    // Predicated region
    $region26: #{generator_forward.1} parent=1 // pred_check
      _
    $region27: #{generator_forward.1} parent=1 // pred_check_branch
      %87 = sbr.rel (0) target = $region29
    $region28: #{generator_forward.1} parent=1 // pred_region
      _
    $region29: #{generator_forward.1} parent=1 // pred_fallthru
      _
    // Predicated region
    $region30: #{generator_forward.1} parent=1 // pred_check
      _
    $region31: #{generator_forward.1} parent=1 // pred_check_branch
      %89 = sbr.rel (0) target = $region33
    $region32: #{generator_forward.1} parent=1 // pred_region
      %91 = vsyncadd [#allocation11], 0
      %s92 = sshll.u32 %s7, 4
      %s93 = int_to_ptr.hbm [resolvable:$true] %s92
      %s94 = sshll.u32 [#allocation10], 4
      %s95 = int_to_ptr.vmem [resolvable:$true] %s94
      %100 = dma.hbm_to_vmem [thread:$0]  %s93, 512, %s95, [#allocation11], 256, 256, 16
    $region33: #{generator_forward.1} parent=1 // pred_fallthru
      _
    // Predicated region
    $region34: #{generator_forward.1} parent=1 // pred_check
      _
    $region35: #{generator_forward.1} parent=1 // pred_check_branch
      %102 = sbr.rel (0) target = $region37
    $region36: #{generator_forward.1} parent=1 // pred_region
      _
    $region37: #{generator_forward.1} parent=1 // pred_fallthru
      _
    // Predicated region
    $region38: #{generator_forward.1} parent=1 // pred_check
      _
    $region39: #{generator_forward.1} parent=1 // pred_check_branch
      %104 = sbr.rel (0) target = $region41
    $region40: #{generator_forward.1} parent=1 // pred_region
      %106 = vsyncadd [#allocation11], 0
      %s108 = sshll.u32 %s9, 4
      %s109 = int_to_ptr.hbm [resolvable:$true] %s108
      %s110 = sshll.u32 [#allocation12], 4
      %s111 = int_to_ptr.vmem [resolvable:$true] %s110
      %113 = dma.hbm_to_vmem [thread:$0]  %s109, 512, %s111, [#allocation11]
    $region41: #{generator_forward.1} parent=1 // pred_fallthru
      _
    // Predicated region
    $region42: #{generator_forward.1} parent=1 // pred_check
      _
    $region43: #{generator_forward.1} parent=1 // pred_check_branch
      %115 = sbr.rel (0) target = $region45
    $region44: #{generator_forward.1} parent=1 // pred_region
      %117 = vsyncadd [#allocation14], 0
      %s119 = sshll.u32 %s10, 4
      %s120 = int_to_ptr.hbm [resolvable:$true] %s119
      %s121 = sshll.u32 [#allocation13], 4
      %s122 = int_to_ptr.vmem [resolvable:$true] %s121
      %124 = dma.hbm_to_vmem [thread:$0]  %s120, 16, %s122, [#allocation14]
    $region45: #{generator_forward.1} parent=1 // pred_fallthru
      _
    // Predicated region
    $region46: #{generator_forward.1} parent=1 // pred_check
      _
    $region47: #{generator_forward.1} parent=1 // pred_check_branch
      %126 = sbr.rel (0) target = $region49
    $region48: #{generator_forward.1} parent=1 // pred_region
      %128 = vsyncadd [#allocation14], 0
      %s130 = sshll.u32 %s11, 4
      %s131 = int_to_ptr.hbm [resolvable:$true] %s130
      %s132 = sshll.u32 [#allocation15], 4
      %s133 = int_to_ptr.vmem [resolvable:$true] %s132
      %135 = dma.hbm_to_vmem [thread:$0]  %s131, 16, %s133, [#allocation14]
    $region49: #{generator_forward.1} parent=1 // pred_fallthru
      _
    // Predicated region
    $region50: #{generator_forward.1} parent=1 // pred_check
      _
    $region51: #{generator_forward.1} parent=1 // pred_check_branch
      %137 = sbr.rel (0) target = $region53
    $region52: #{generator_forward.1} parent=1 // pred_region
      %139 = vsyncadd [#allocation17], 0
      %s141 = sshll.u32 %s12, 4
      %s142 = int_to_ptr.hbm [resolvable:$true] %s141
      %s143 = sshll.u32 [#allocation16], 4
      %s144 = int_to_ptr.vmem [resolvable:$true] %s143
      %146 = dma.hbm_to_vmem [thread:$0]  %s142, 16, %s144, [#allocation17]
    $region53: #{generator_forward.1} parent=1 // pred_fallthru
      _
    // Predicated region
    $region54: #{generator_forward.1} parent=1 // pred_check
      _
    $region55: #{generator_forward.1} parent=1 // pred_check_branch
      %148 = sbr.rel (0) target = $region57
    $region56: #{generator_forward.1} parent=1 // pred_region
      %150 = vsyncadd [#allocation17], 0
      %s152 = sshll.u32 %s13, 4
      %s153 = int_to_ptr.hbm [resolvable:$true] %s152
      %s154 = sshll.u32 [#allocation18], 4
      %s155 = int_to_ptr.vmem [resolvable:$true] %s154
      %157 = dma.hbm_to_vmem [thread:$0]  %s153, 16, %s155, [#allocation17]
    $region57: #{generator_forward.1} parent=1 // pred_fallthru
      _
    // Predicated region
    $region58: #{generator_forward.1} parent=1 // pred_check
      _
    $region59: #{generator_forward.1} parent=1 // pred_check_branch
      %159 = sbr.rel (0) target = $region61
    $region60: #{generator_forward.1} parent=1 // pred_region
      %161 = dma.done [#allocation3], 32
    $region61: #{generator_forward.1} parent=1 // pred_fallthru
      _
    // Predicated region
    $region62: #{generator_forward.1} parent=1 // pred_check
      _
    $region63: #{generator_forward.1} parent=1 // pred_check_branch
      %163 = sbr.rel (0) target = $region65
    $region64: #{generator_forward.1} parent=1 // pred_region
      %165 = dma.done [#allocation5], 256
    $region65: #{generator_forward.1} parent=1 // pred_fallthru
      _
    // Predicated region
    $region66: #{generator_forward.1} parent=1 // pred_check
      _
    $region67: #{generator_forward.1} parent=1 // pred_check_branch
      %167 = sbr.rel (0) target = $region69
    $region68: #{generator_forward.1} parent=1 // pred_region
      %169 = dma.done [#allocation5], 128
    $region69: #{generator_forward.1} parent=1 // pred_fallthru
      _
    // Predicated region
    $region70: #{generator_forward.1} parent=1 // pred_check
      _
    $region71: #{generator_forward.1} parent=1 // pred_check_branch
      %171 = sbr.rel (0) target = $region73
    $region72: #{generator_forward.1} parent=1 // pred_region
      %173 = dma.done [#allocation8], 16384
    $region73: #{generator_forward.1} parent=1 // pred_fallthru
      _
    // Predicated region
    $region74: #{generator_forward.1} parent=1 // pred_check
      _
    $region75: #{generator_forward.1} parent=1 // pred_check_branch
      %175 = sbr.rel (0) target = $region77
    $region76: #{generator_forward.1} parent=1 // pred_region
      %177 = dma.done [#allocation8], 49152
    $region77: #{generator_forward.1} parent=1 // pred_fallthru
      _
    // Predicated region
    $region78: #{generator_forward.1} parent=1 // pred_check
      _
    $region79: #{generator_forward.1} parent=1 // pred_check_branch
      %179 = sbr.rel (0) target = $region81
    $region80: #{generator_forward.1} parent=1 // pred_region
      %181 = dma.done [#allocation11], 512
    $region81: #{generator_forward.1} parent=1 // pred_fallthru
      _
    // Predicated region
    $region82: #{generator_forward.1} parent=1 // pred_check
      _
    $region83: #{generator_forward.1} parent=1 // pred_check_branch
      %183 = sbr.rel (0) target = $region85
    $region84: #{generator_forward.1} parent=1 // pred_region
      %185 = dma.done [#allocation11], 512
    $region85: #{generator_forward.1} parent=1 // pred_fallthru
      _
    // Predicated region
    $region86: #{generator_forward.1} parent=1 // pred_check
      _
    $region87: #{generator_forward.1} parent=1 // pred_check_branch
      %187 = sbr.rel (0) target = $region89
    $region88: #{generator_forward.1} parent=1 // pred_region
      %189 = dma.done [#allocation14], 16
    $region89: #{generator_forward.1} parent=1 // pred_fallthru
      _
    // Predicated region
    $region90: #{generator_forward.1} parent=1 // pred_check
      _
    $region91: #{generator_forward.1} parent=1 // pred_check_branch
      %191 = sbr.rel (0) target = $region93
    $region92: #{generator_forward.1} parent=1 // pred_region
      %193 = dma.done [#allocation14], 16
    $region93: #{generator_forward.1} parent=1 // pred_fallthru
      _
    // Predicated region
    $region94: #{generator_forward.1} parent=1 // pred_check
      _
    $region95: #{generator_forward.1} parent=1 // pred_check_branch
      %195 = sbr.rel (0) target = $region97
    $region96: #{generator_forward.1} parent=1 // pred_region
      %197 = dma.done [#allocation17], 16
    $region97: #{generator_forward.1} parent=1 // pred_fallthru
      _
    // Predicated region
    $region98: #{generator_forward.1} parent=1 // pred_check
      _
    $region99: #{generator_forward.1} parent=1 // pred_check_branch
      %199 = sbr.rel (0) target = $region101
    $region100: #{generator_forward.1} parent=1 // pred_region
      %201 = dma.done [#allocation17], 16
    $region101: #{generator_forward.1} parent=1 // pred_fallthru
      _
    %v202 = vld [vmem:[#allocation2] sm:$0x3]
    %v203 = vld [vmem:[#allocation4] sm:$0xff]
    %v204 = vld [vmem:[#allocation4 + $0x8] sm:$0xff]
    %vm205 = vcmask 64512
    %v207 = vsel %vm205, %v202, 0
    %209 = vmatpush.msra.mxu0 0.0
    %210 = vmatpush.msra.mxu0 0.0
    %211 = vmatpush.msra.mxu0 0.0
    %212 = vmatpush.msra.mxu0 0.0
    %213 = vmatpush.msra.mxu0 0.0
    %214 = vmatpush.msra.mxu0 0.0
    %215 = vmatpush.msra.mxu0 0.0
    %216 = vmatpush.msra.mxu0 0.0
    %217 = vmatpush.msra.mxu0 0.0
    %218 = vmatpush.msra.mxu0 0.0
    %219 = vmatpush.msra.mxu0 0.0
    %220 = vmatpush.msra.mxu0 0.0
    %221 = vmatpush.msra.mxu0 0.0
    %222 = vmatpush.msra.mxu0 0.0
    %223 = vmatpush.msra.mxu0 0.0
    %224 = vmatpush.msra.mxu0 %v203
    %225 = vmatmul.f32.gmra.mxu0 %v207
    %v226 = vpop.f32.mrf.mxu0
    %v227 = vadd.f32 0.0, %v226
    %228 = vdwg.mxu0
    %229 = vmatpush.msra.mxu0 0.0
    %230 = vmatpush.msra.mxu0 0.0
    %231 = vmatpush.msra.mxu0 0.0
    %232 = vmatpush.msra.mxu0 0.0
    %233 = vmatpush.msra.mxu0 0.0
    %234 = vmatpush.msra.mxu0 0.0
    %235 = vmatpush.msra.mxu0 0.0
    %236 = vmatpush.msra.mxu0 0.0
    %237 = vmatpush.msra.mxu0 0.0
    %238 = vmatpush.msra.mxu0 0.0
    %239 = vmatpush.msra.mxu0 0.0
    %240 = vmatpush.msra.mxu0 0.0
    %241 = vmatpush.msra.mxu0 0.0
    %242 = vmatpush.msra.mxu0 0.0
    %243 = vmatpush.msra.mxu0 0.0
    %244 = vmatpush.msra.mxu0 %v204
    %245 = vmatmul.f32.gmra.mxu0 %v207
    %v246 = vpop.f32.mrf.mxu0
    %v247 = vadd.f32 0.0, %v246
    %248 = vdwg.mxu0
    %v249 = vld [vmem:[#allocation6] sm:$0xff]
    %250 = vmatpush.msra.mxu0 0.0
    %251 = vmatpush.msra.mxu0 0.0
    %252 = vmatpush.msra.mxu0 0.0
    %253 = vmatpush.msra.mxu0 0.0
    %254 = vmatpush.msra.mxu0 0.0
    %255 = vmatpush.msra.mxu0 0.0
    %256 = vmatpush.msra.mxu0 0.0
    %257 = vmatpush.msra.mxu0 0.0
    %258 = vmatpush.msra.mxu0 0.0
    %259 = vmatpush.msra.mxu0 0.0
    %260 = vmatpush.msra.mxu0 0.0
    %261 = vmatpush.msra.mxu0 0.0
    %262 = vmatpush.msra.mxu0 0.0
    %263 = vmatpush.msra.mxu0 0.0
    %264 = vmatpush.msra.mxu0 0.0
    %265 = vmatpush.msra.mxu0 %v249
    %266 = vmatmul.f32.gmra.mxu0 %v207
    %v267 = vpop.f32.mrf.mxu0
    %v268 = vadd.f32 0.0, %v267
    %269 = vdwg.mxu0
    %v270 = vld [vmem:[%s6] sm:$0xff]
    %v271 = vld [vmem:[%s6 + $0x8] sm:$0xff]
    %v272 = vld [vmem:[%s6 + $0x10] sm:$0xff]
    %v273 = vld [vmem:[%s6 + $0x18] sm:$0xff]
    %v274 = vld [vmem:[%s6 + $0x20] sm:$0xff]
    %v275 = vld [vmem:[%s6 + $0x28] sm:$0xff]
    %v276 = vld [vmem:[%s6 + $0x30] sm:$0xff]
    %v277 = vld [vmem:[%s6 + $0x38] sm:$0xff]
    %v278 = vld [vmem:[%s6 + $0x40] sm:$0xff]
    %v279 = vld [vmem:[%s6 + $0x48] sm:$0xff]
    %v280 = vld [vmem:[%s6 + $0x50] sm:$0xff]
    %v281 = vld [vmem:[%s6 + $0x58] sm:$0xff]
    %v282 = vld [vmem:[%s6 + $0x60] sm:$0xff]
    %v283 = vld [vmem:[%s6 + $0x68] sm:$0xff]
    %v284 = vld [vmem:[%s6 + $0x70] sm:$0xff]
    %v285 = vld [vmem:[%s6 + $0x78] sm:$0xff]
    %v286 = vld [vmem:[%s6 + $0x80] sm:$0xff]
    %v287 = vld [vmem:[%s6 + $0x88] sm:$0xff]
    %v288 = vld [vmem:[%s6 + $0x90] sm:$0xff]
    %v289 = vld [vmem:[%s6 + $0x98] sm:$0xff]
    %v290 = vld [vmem:[%s6 + $0xa0] sm:$0xff]
    %v291 = vld [vmem:[%s6 + $0xa8] sm:$0xff]
    %v292 = vld [vmem:[%s6 + $0xb0] sm:$0xff]
    %v293 = vld [vmem:[%s6 + $0xb8] sm:$0xff]
    %v294 = vld [vmem:[%s6 + $0xc0] sm:$0xff]
    %v295 = vld [vmem:[%s6 + $0xc8] sm:$0xff]
    %v296 = vld [vmem:[%s6 + $0xd0] sm:$0xff]
    %v297 = vld [vmem:[%s6 + $0xd8] sm:$0xff]
    %v298 = vld [vmem:[%s6 + $0xe0] sm:$0xff]
    %v299 = vld [vmem:[%s6 + $0xe8] sm:$0xff]
    %v300 = vld [vmem:[%s6 + $0xf0] sm:$0xff]
    %v301 = vld [vmem:[%s6 + $0xf8] sm:$0xff]
    %v302 = vld [vmem:[#allocation10] sm:$0xff]
    %v303 = vld [vmem:[#allocation10 + $0x8] sm:$0xff]
    %v304 = vld [vmem:[#allocation10 + $0x10] sm:$0xff]
    %v305 = vld [vmem:[#allocation10 + $0x18] sm:$0xff]
    %v306 = vld [vmem:[#allocation13] sm:$0x1]
    %v307 = vld [vmem:[#allocation15] sm:$0x1]
    %vm308 = vcmask 123904
    %v309 = vsel %vm308, %v268, 0.0
    %v310 = vrot.slane %v309, 4
    %v311 = vadd.f32 %v309, %v310
    %v312 = vrot.slane %v311, 2
    %v313 = vadd.f32 %v311, %v312
    %v314 = vrot.slane %v313, 1
    %v315 = vadd.f32 %v313, %v314
    %v316 = vmul.f32 %v315, 0.03125
    %v317 = vmul.f32 %v227, %v227
    %v318 = vmul.f32 %v247, %v247
    %319 = vmatpush.msra.mxu0 %v285
    %320 = vmatpush.msra.mxu0 %v284
    %321 = vmatpush.msra.mxu0 %v283
    %322 = vmatpush.msra.mxu0 %v282
    %323 = vmatpush.msra.mxu0 %v281
    %324 = vmatpush.msra.mxu0 %v280
    %325 = vmatpush.msra.mxu0 %v279
    %326 = vmatpush.msra.mxu0 %v278
    %327 = vmatpush.msra.mxu0 %v277
    %328 = vmatpush.msra.mxu0 %v276
    %329 = vmatpush.msra.mxu0 %v275
    %330 = vmatpush.msra.mxu0 %v274
    %331 = vmatpush.msra.mxu0 %v273
    %332 = vmatpush.msra.mxu0 %v272
    %333 = vmatpush.msra.mxu0 %v271
    %334 = vmatpush.msra.mxu0 %v270
    %335 = vmatmul.f32.gmra.mxu0 %v317
    %v336 = vpop.f32.mrf.mxu0
    %v337 = vadd.f32 0.0, %v336
    %338 = vdwg.mxu0
    %339 = vmatpush.msra.mxu0 %v301
    %340 = vmatpush.msra.mxu0 %v300
    %341 = vmatpush.msra.mxu0 %v299
    %342 = vmatpush.msra.mxu0 %v298
    %343 = vmatpush.msra.mxu0 %v297
    %344 = vmatpush.msra.mxu0 %v296
    %345 = vmatpush.msra.mxu0 %v295
    %346 = vmatpush.msra.mxu0 %v294
    %347 = vmatpush.msra.mxu0 %v293
    %348 = vmatpush.msra.mxu0 %v292
    %349 = vmatpush.msra.mxu0 %v291
    %350 = vmatpush.msra.mxu0 %v290
    %351 = vmatpush.msra.mxu0 %v289
    %352 = vmatpush.msra.mxu0 %v288
    %353 = vmatpush.msra.mxu0 %v287
    %354 = vmatpush.msra.mxu0 %v286
    %355 = vmatmul.f32.gmra.mxu0 %v318
    %v356 = vpop.f32.mrf.mxu0
    %v357 = vadd.f32 %v337, %v356
    %358 = vdwg.mxu0
    %v359 = vsel %vm308, %v357, 0.0
    %v360 = vrot.slane %v359, 4
    %v361 = vadd.f32 %v359, %v360
    %v362 = vrot.slane %v361, 2
    %v363 = vadd.f32 %v361, %v362
    %v364 = vrot.slane %v363, 1
    %v365 = vadd.f32 %v363, %v364
    %v366 = vmul.f32 %v365, 0.03125
    %v367 = vmul.f32 %v316, %v316
    %v368 = vsub.f32 %v366, %v367
    %v369 = vadd.f32 %v368, 1e-05
    %v370 = vrsqrt.pop %v369
    %v371 = vmul.f32 %v370, %v369
    %v372 = vmul.f32 %v371, %v370
    %v373 = vmul.f32 0.5, %v372
    %v374 = vsub.f32 1.5, %v373
    %v375 = vmul.f32 %v370, %v374
    %vm376 = vweird.f32 %v369
    %vm377 = vweird.f32 %v370
    %vm378 = vmor %vm376, %vm377
    %v379 = vsel %vm378, %v370, %v375
    %v380 = vmul.f32 %v306, %v379
    %v381 = vmul.f32 %v316, %v380
    %v382 = vsub.f32 %v307, %v381
    %v384 = vperm.slane %v382, 0
    %vm386 = vcmask 1040384
    %v387 = vsel %vm386, %v380, %v384
    %vm388 = vcmask 130048
    %v390 = vsel %vm388, %v387, 0
    %392 = vmatpush.msra.mxu0 0.0
    %393 = vmatpush.msra.mxu0 0.0
    %394 = vmatpush.msra.mxu0 0.0
    %395 = vmatpush.msra.mxu0 0.0
    %396 = vmatpush.msra.mxu0 0.0
    %397 = vmatpush.msra.mxu0 0.0
    %398 = vmatpush.msra.mxu0 0.0
    %399 = vmatpush.msra.mxu0 0.0
    %400 = vmatpush.msra.mxu0 0.0
    %401 = vmatpush.msra.mxu0 0.0
    %402 = vmatpush.msra.mxu0 0.0
    %403 = vmatpush.msra.mxu0 0.0
    %404 = vmatpush.msra.mxu0 0.0
    %405 = vmatpush.msra.mxu0 0.0
    %406 = vmatpush.msra.mxu0 %v304
    %407 = vmatpush.msra.mxu0 %v302
    %408 = vmatmul.f32.gmra.mxu0 %v390
    %v409 = vpop.f32.mrf.mxu0
    %v410 = vadd.f32 0.0, %v409
    %411 = vdwg.mxu0
    %412 = vmatpush.msra.mxu0 0.0
    %413 = vmatpush.msra.mxu0 0.0
    %414 = vmatpush.msra.mxu0 0.0
    %415 = vmatpush.msra.mxu0 0.0
    %416 = vmatpush.msra.mxu0 0.0
    %417 = vmatpush.msra.mxu0 0.0
    %418 = vmatpush.msra.mxu0 0.0
    %419 = vmatpush.msra.mxu0 0.0
    %420 = vmatpush.msra.mxu0 0.0
    %421 = vmatpush.msra.mxu0 0.0
    %422 = vmatpush.msra.mxu0 0.0
    %423 = vmatpush.msra.mxu0 0.0
    %424 = vmatpush.msra.mxu0 0.0
    %425 = vmatpush.msra.mxu0 0.0
    %426 = vmatpush.msra.mxu0 %v305
    %427 = vmatpush.msra.mxu0 %v303
    %428 = vmatmul.f32.gmra.mxu0 %v390
    %v429 = vpop.f32.mrf.mxu0
    %v430 = vadd.f32 0.0, %v429
    %431 = vdwg.mxu0
    %v432 = vperm.slane %v410, 0
    %v433 = vperm.slane %v430, 0
    %v434 = vmul.f32 %v227, %v432
    %v435 = vmul.f32 %v247, %v433
    %v436 = vperm.slane %v410, 1
    %v437 = vperm.slane %v430, 1
    %v438 = vadd.f32 %v434, %v436
    %v439 = vadd.f32 %v435, %v437
    %v440 = vmax.f32 %v438, 0.0
    %v441 = vmax.f32 %v439, 0.0
    %v442 = vld [vmem:[#allocation7] sm:$0xff]
    %v443 = vld [vmem:[#allocation7 + $0x8] sm:$0xff]
    %v444 = vld [vmem:[#allocation7 + $0x10] sm:$0xff]
    %v445 = vld [vmem:[#allocation7 + $0x18] sm:$0xff]
    %v446 = vld [vmem:[#allocation7 + $0x20] sm:$0xff]
    %v447 = vld [vmem:[#allocation7 + $0x28] sm:$0xff]
    %v448 = vld [vmem:[#allocation7 + $0x30] sm:$0xff]
    %v449 = vld [vmem:[#allocation7 + $0x38] sm:$0xff]
    %v450 = vld [vmem:[#allocation7 + $0x40] sm:$0xff]
    %v451 = vld [vmem:[#allocation7 + $0x48] sm:$0xff]
    %v452 = vld [vmem:[#allocation7 + $0x50] sm:$0xff]
    %v453 = vld [vmem:[#allocation7 + $0x58] sm:$0xff]
    %v454 = vld [vmem:[#allocation7 + $0x60] sm:$0xff]
    %v455 = vld [vmem:[#allocation7 + $0x68] sm:$0xff]
    %v456 = vld [vmem:[#allocation7 + $0x70] sm:$0xff]
    %v457 = vld [vmem:[#allocation7 + $0x78] sm:$0xff]
    %v458 = vld [vmem:[#allocation7 + $0x80] sm:$0xff]
    %v459 = vld [vmem:[#allocation7 + $0x88] sm:$0xff]
    %v460 = vld [vmem:[#allocation7 + $0x90] sm:$0xff]
    %v461 = vld [vmem:[#allocation7 + $0x98] sm:$0xff]
    %v462 = vld [vmem:[#allocation7 + $0xa0] sm:$0xff]
    %v463 = vld [vmem:[#allocation7 + $0xa8] sm:$0xff]
    %v464 = vld [vmem:[#allocation7 + $0xb0] sm:$0xff]
    %v465 = vld [vmem:[#allocation7 + $0xb8] sm:$0xff]
    %v466 = vld [vmem:[#allocation7 + $0xc0] sm:$0xff]
    %v467 = vld [vmem:[#allocation7 + $0xc8] sm:$0xff]
    %v468 = vld [vmem:[#allocation7 + $0xd0] sm:$0xff]
    %v469 = vld [vmem:[#allocation7 + $0xd8] sm:$0xff]
    %v470 = vld [vmem:[#allocation7 + $0xe0] sm:$0xff]
    %v471 = vld [vmem:[#allocation7 + $0xe8] sm:$0xff]
    %v472 = vld [vmem:[#allocation7 + $0xf0] sm:$0xff]
    %v473 = vld [vmem:[#allocation7 + $0xf8] sm:$0xff]
    %v474 = vld [vmem:[#allocation7 + $0x100] sm:$0xff]
    %v475 = vld [vmem:[#allocation7 + $0x108] sm:$0xff]
    %v476 = vld [vmem:[#allocation7 + $0x110] sm:$0xff]
    %v477 = vld [vmem:[#allocation7 + $0x118] sm:$0xff]
    %v478 = vld [vmem:[#allocation7 + $0x120] sm:$0xff]
    %v479 = vld [vmem:[#allocation7 + $0x128] sm:$0xff]
    %v480 = vld [vmem:[#allocation7 + $0x130] sm:$0xff]
    %v481 = vld [vmem:[#allocation7 + $0x138] sm:$0xff]
    %v482 = vld [vmem:[#allocation7 + $0x140] sm:$0xff]
    %v483 = vld [vmem:[#allocation7 + $0x148] sm:$0xff]
    %v484 = vld [vmem:[#allocation7 + $0x150] sm:$0xff]
    %v485 = vld [vmem:[#allocation7 + $0x158] sm:$0xff]
    %v486 = vld [vmem:[#allocation7 + $0x160] sm:$0xff]
    %v487 = vld [vmem:[#allocation7 + $0x168] sm:$0xff]
    %v488 = vld [vmem:[#allocation7 + $0x170] sm:$0xff]
    %v489 = vld [vmem:[#allocation7 + $0x178] sm:$0xff]
    %v490 = vld [vmem:[#allocation7 + $0x180] sm:$0xff]
    %v491 = vld [vmem:[#allocation7 + $0x188] sm:$0xff]
    %v492 = vld [vmem:[#allocation7 + $0x190] sm:$0xff]
    %v493 = vld [vmem:[#allocation7 + $0x198] sm:$0xff]
    %v494 = vld [vmem:[#allocation7 + $0x1a0] sm:$0xff]
    %v495 = vld [vmem:[#allocation7 + $0x1a8] sm:$0xff]
    %v496 = vld [vmem:[#allocation7 + $0x1b0] sm:$0xff]
    %v497 = vld [vmem:[#allocation7 + $0x1b8] sm:$0xff]
    %v498 = vld [vmem:[#allocation7 + $0x1c0] sm:$0xff]
    %v499 = vld [vmem:[#allocation7 + $0x1c8] sm:$0xff]
    %v500 = vld [vmem:[#allocation7 + $0x1d0] sm:$0xff]
    %v501 = vld [vmem:[#allocation7 + $0x1d8] sm:$0xff]
    %v502 = vld [vmem:[#allocation7 + $0x1e0] sm:$0xff]
    %v503 = vld [vmem:[#allocation7 + $0x1e8] sm:$0xff]
    %v504 = vld [vmem:[#allocation7 + $0x1f0] sm:$0xff]
    %v505 = vld [vmem:[#allocation7 + $0x1f8] sm:$0xff]
    %v506 = vld [vmem:[#allocation7 + $0x200] sm:$0xff]
    %v507 = vld [vmem:[#allocation7 + $0x208] sm:$0xff]
    %v508 = vld [vmem:[#allocation7 + $0x210] sm:$0xff]
    %v509 = vld [vmem:[#allocation7 + $0x218] sm:$0xff]
    %v510 = vld [vmem:[#allocation7 + $0x220] sm:$0xff]
    %v511 = vld [vmem:[#allocation7 + $0x228] sm:$0xff]
    %v512 = vld [vmem:[#allocation7 + $0x230] sm:$0xff]
    %v513 = vld [vmem:[#allocation7 + $0x238] sm:$0xff]
    %v514 = vld [vmem:[#allocation7 + $0x240] sm:$0xff]
    %v515 = vld [vmem:[#allocation7 + $0x248] sm:$0xff]
    %v516 = vld [vmem:[#allocation7 + $0x250] sm:$0xff]
    %v517 = vld [vmem:[#allocation7 + $0x258] sm:$0xff]
    %v518 = vld [vmem:[#allocation7 + $0x260] sm:$0xff]
    %v519 = vld [vmem:[#allocation7 + $0x268] sm:$0xff]
    %v520 = vld [vmem:[#allocation7 + $0x270] sm:$0xff]
    %v521 = vld [vmem:[#allocation7 + $0x278] sm:$0xff]
    %v522 = vld [vmem:[#allocation7 + $0x280] sm:$0xff]
    %v523 = vld [vmem:[#allocation7 + $0x288] sm:$0xff]
    %v524 = vld [vmem:[#allocation7 + $0x290] sm:$0xff]
    %v525 = vld [vmem:[#allocation7 + $0x298] sm:$0xff]
    %v526 = vld [vmem:[#allocation7 + $0x2a0] sm:$0xff]
    %v527 = vld [vmem:[#allocation7 + $0x2a8] sm:$0xff]
    %v528 = vld [vmem:[#allocation7 + $0x2b0] sm:$0xff]
    %v529 = vld [vmem:[#allocation7 + $0x2b8] sm:$0xff]
    %v530 = vld [vmem:[#allocation7 + $0x2c0] sm:$0xff]
    %v531 = vld [vmem:[#allocation7 + $0x2c8] sm:$0xff]
    %v532 = vld [vmem:[#allocation7 + $0x2d0] sm:$0xff]
    %v533 = vld [vmem:[#allocation7 + $0x2d8] sm:$0xff]
    %v534 = vld [vmem:[#allocation7 + $0x2e0] sm:$0xff]
    %v535 = vld [vmem:[#allocation7 + $0x2e8] sm:$0xff]
    %v536 = vld [vmem:[#allocation7 + $0x2f0] sm:$0xff]
    %v537 = vld [vmem:[#allocation7 + $0x2f8] sm:$0xff]
    %v538 = vld [vmem:[#allocation7 + $0x300] sm:$0xff]
    %v539 = vld [vmem:[#allocation7 + $0x308] sm:$0xff]
    %v540 = vld [vmem:[#allocation7 + $0x310] sm:$0xff]
    %v541 = vld [vmem:[#allocation7 + $0x318] sm:$0xff]
    %v542 = vld [vmem:[#allocation7 + $0x320] sm:$0xff]
    %v543 = vld [vmem:[#allocation7 + $0x328] sm:$0xff]
    %v544 = vld [vmem:[#allocation7 + $0x330] sm:$0xff]
    %v545 = vld [vmem:[#allocation7 + $0x338] sm:$0xff]
    %v546 = vld [vmem:[#allocation7 + $0x340] sm:$0xff]
    %v547 = vld [vmem:[#allocation7 + $0x348] sm:$0xff]
    %v548 = vld [vmem:[#allocation7 + $0x350] sm:$0xff]
    %v549 = vld [vmem:[#allocation7 + $0x358] sm:$0xff]
    %v550 = vld [vmem:[#allocation7 + $0x360] sm:$0xff]
    %v551 = vld [vmem:[#allocation7 + $0x368] sm:$0xff]
    %v552 = vld [vmem:[#allocation7 + $0x370] sm:$0xff]
    %v553 = vld [vmem:[#allocation7 + $0x378] sm:$0xff]
    %v554 = vld [vmem:[#allocation7 + $0x380] sm:$0xff]
    %v555 = vld [vmem:[#allocation7 + $0x388] sm:$0xff]
    %v556 = vld [vmem:[#allocation7 + $0x390] sm:$0xff]
    %v557 = vld [vmem:[#allocation7 + $0x398] sm:$0xff]
    %v558 = vld [vmem:[#allocation7 + $0x3a0] sm:$0xff]
    %v559 = vld [vmem:[#allocation7 + $0x3a8] sm:$0xff]
    %v560 = vld [vmem:[#allocation7 + $0x3b0] sm:$0xff]
    %v561 = vld [vmem:[#allocation7 + $0x3b8] sm:$0xff]
    %v562 = vld [vmem:[#allocation7 + $0x3c0] sm:$0xff]
    %v563 = vld [vmem:[#allocation7 + $0x3c8] sm:$0xff]
    %v564 = vld [vmem:[#allocation7 + $0x3d0] sm:$0xff]
    %v565 = vld [vmem:[#allocation7 + $0x3d8] sm:$0xff]
    %v566 = vld [vmem:[#allocation7 + $0x3e0] sm:$0xff]
    %v567 = vld [vmem:[#allocation7 + $0x3e8] sm:$0xff]
    %v568 = vld [vmem:[#allocation7 + $0x3f0] sm:$0xff]
    %v569 = vld [vmem:[#allocation7 + $0x3f8] sm:$0xff]
    %570 = vmatpush.msra.mxu0 %v502
    %571 = vmatpush.msra.mxu0 %v498
    %572 = vmatpush.msra.mxu0 %v494
    %573 = vmatpush.msra.mxu0 %v490
    %574 = vmatpush.msra.mxu0 %v486
    %575 = vmatpush.msra.mxu0 %v482
    %576 = vmatpush.msra.mxu0 %v478
    %577 = vmatpush.msra.mxu0 %v474
    %578 = vmatpush.msra.mxu0 %v470
    %579 = vmatpush.msra.mxu0 %v466
    %580 = vmatpush.msra.mxu0 %v462
    %581 = vmatpush.msra.mxu0 %v458
    %582 = vmatpush.msra.mxu0 %v454
    %583 = vmatpush.msra.mxu0 %v450
    %584 = vmatpush.msra.mxu0 %v446
    %585 = vmatpush.msra.mxu0 %v442
    %586 = vmatmul.f32.gmra.mxu0 %v440
    %v587 = vpop.f32.mrf.mxu0
    %v588 = vadd.f32 0.0, %v587
    %589 = vdwg.mxu0
    %590 = vmatpush.msra.mxu0 %v566
    %591 = vmatpush.msra.mxu0 %v562
    %592 = vmatpush.msra.mxu0 %v558
    %593 = vmatpush.msra.mxu0 %v554
    %594 = vmatpush.msra.mxu0 %v550
    %595 = vmatpush.msra.mxu0 %v546
    %596 = vmatpush.msra.mxu0 %v542
    %597 = vmatpush.msra.mxu0 %v538
    %598 = vmatpush.msra.mxu0 %v534
    %599 = vmatpush.msra.mxu0 %v530
    %600 = vmatpush.msra.mxu0 %v526
    %601 = vmatpush.msra.mxu0 %v522
    %602 = vmatpush.msra.mxu0 %v518
    %603 = vmatpush.msra.mxu0 %v514
    %604 = vmatpush.msra.mxu0 %v510
    %605 = vmatpush.msra.mxu0 %v506
    %606 = vmatmul.f32.gmra.mxu0 %v441
    %v607 = vpop.f32.mrf.mxu0
    %v608 = vadd.f32 %v588, %v607
    %609 = vdwg.mxu0
    %610 = vmatpush.msra.mxu0 %v503
    %611 = vmatpush.msra.mxu0 %v499
    %612 = vmatpush.msra.mxu0 %v495
    %613 = vmatpush.msra.mxu0 %v491
    %614 = vmatpush.msra.mxu0 %v487
    %615 = vmatpush.msra.mxu0 %v483
    %616 = vmatpush.msra.mxu0 %v479
    %617 = vmatpush.msra.mxu0 %v475
    %618 = vmatpush.msra.mxu0 %v471
    %619 = vmatpush.msra.mxu0 %v467
    %620 = vmatpush.msra.mxu0 %v463
    %621 = vmatpush.msra.mxu0 %v459
    %622 = vmatpush.msra.mxu0 %v455
    %623 = vmatpush.msra.mxu0 %v451
    %624 = vmatpush.msra.mxu0 %v447
    %625 = vmatpush.msra.mxu0 %v443
    %626 = vmatmul.f32.gmra.mxu0 %v440
    %v627 = vpop.f32.mrf.mxu0
    %v628 = vadd.f32 0.0, %v627
    %629 = vdwg.mxu0
    %630 = vmatpush.msra.mxu0 %v567
    %631 = vmatpush.msra.mxu0 %v563
    %632 = vmatpush.msra.mxu0 %v559
    %633 = vmatpush.msra.mxu0 %v555
    %634 = vmatpush.msra.mxu0 %v551
    %635 = vmatpush.msra.mxu0 %v547
    %636 = vmatpush.msra.mxu0 %v543
    %637 = vmatpush.msra.mxu0 %v539
    %638 = vmatpush.msra.mxu0 %v535
    %639 = vmatpush.msra.mxu0 %v531
    %640 = vmatpush.msra.mxu0 %v527
    %641 = vmatpush.msra.mxu0 %v523
    %642 = vmatpush.msra.mxu0 %v519
    %643 = vmatpush.msra.mxu0 %v515
    %644 = vmatpush.msra.mxu0 %v511
    %645 = vmatpush.msra.mxu0 %v507
    %646 = vmatmul.f32.gmra.mxu0 %v441
    %v647 = vpop.f32.mrf.mxu0
    %v648 = vadd.f32 %v628, %v647
    %649 = vdwg.mxu0
    %650 = vmatpush.msra.mxu0 %v504
    %651 = vmatpush.msra.mxu0 %v500
    %652 = vmatpush.msra.mxu0 %v496
    %653 = vmatpush.msra.mxu0 %v492
    %654 = vmatpush.msra.mxu0 %v488
    %655 = vmatpush.msra.mxu0 %v484
    %656 = vmatpush.msra.mxu0 %v480
    %657 = vmatpush.msra.mxu0 %v476
    %658 = vmatpush.msra.mxu0 %v472
    %659 = vmatpush.msra.mxu0 %v468
    %660 = vmatpush.msra.mxu0 %v464
    %661 = vmatpush.msra.mxu0 %v460
    %662 = vmatpush.msra.mxu0 %v456
    %663 = vmatpush.msra.mxu0 %v452
    %664 = vmatpush.msra.mxu0 %v448
    %665 = vmatpush.msra.mxu0 %v444
    %666 = vmatmul.f32.gmra.mxu0 %v440
    %v667 = vpop.f32.mrf.mxu0
    %v668 = vadd.f32 0.0, %v667
    %669 = vdwg.mxu0
    %670 = vmatpush.msra.mxu0 %v568
    %671 = vmatpush.msra.mxu0 %v564
    %672 = vmatpush.msra.mxu0 %v560
    %673 = vmatpush.msra.mxu0 %v556
    %674 = vmatpush.msra.mxu0 %v552
    %675 = vmatpush.msra.mxu0 %v548
    %676 = vmatpush.msra.mxu0 %v544
    %677 = vmatpush.msra.mxu0 %v540
    %678 = vmatpush.msra.mxu0 %v536
    %679 = vmatpush.msra.mxu0 %v532
    %680 = vmatpush.msra.mxu0 %v528
    %681 = vmatpush.msra.mxu0 %v524
    %682 = vmatpush.msra.mxu0 %v520
    %683 = vmatpush.msra.mxu0 %v516
    %684 = vmatpush.msra.mxu0 %v512
    %685 = vmatpush.msra.mxu0 %v508
    %686 = vmatmul.f32.gmra.mxu0 %v441
    %v687 = vpop.f32.mrf.mxu0
    %v688 = vadd.f32 %v668, %v687
    %689 = vdwg.mxu0
    %690 = vmatpush.msra.mxu0 %v505
    %691 = vmatpush.msra.mxu0 %v501
    %692 = vmatpush.msra.mxu0 %v497
    %693 = vmatpush.msra.mxu0 %v493
    %694 = vmatpush.msra.mxu0 %v489
    %695 = vmatpush.msra.mxu0 %v485
    %696 = vmatpush.msra.mxu0 %v481
    %697 = vmatpush.msra.mxu0 %v477
    %698 = vmatpush.msra.mxu0 %v473
    %699 = vmatpush.msra.mxu0 %v469
    %700 = vmatpush.msra.mxu0 %v465
    %701 = vmatpush.msra.mxu0 %v461
    %702 = vmatpush.msra.mxu0 %v457
    %703 = vmatpush.msra.mxu0 %v453
    %704 = vmatpush.msra.mxu0 %v449
    %705 = vmatpush.msra.mxu0 %v445
    %706 = vmatmul.f32.gmra.mxu0 %v440
    %v707 = vpop.f32.mrf.mxu0
    %v708 = vadd.f32 0.0, %v707
    %709 = vdwg.mxu0
    %710 = vmatpush.msra.mxu0 %v569
    %711 = vmatpush.msra.mxu0 %v565
    %712 = vmatpush.msra.mxu0 %v561
    %713 = vmatpush.msra.mxu0 %v557
    %714 = vmatpush.msra.mxu0 %v553
    %715 = vmatpush.msra.mxu0 %v549
    %716 = vmatpush.msra.mxu0 %v545
    %717 = vmatpush.msra.mxu0 %v541
    %718 = vmatpush.msra.mxu0 %v537
    %719 = vmatpush.msra.mxu0 %v533
    %720 = vmatpush.msra.mxu0 %v529
    %721 = vmatpush.msra.mxu0 %v525
    %722 = vmatpush.msra.mxu0 %v521
    %723 = vmatpush.msra.mxu0 %v517
    %724 = vmatpush.msra.mxu0 %v513
    %725 = vmatpush.msra.mxu0 %v509
    %726 = vmatmul.f32.gmra.mxu0 %v441
    %v727 = vpop.f32.mrf.mxu0
    %v728 = vadd.f32 %v708, %v727
    %729 = vdwg.mxu0
    %v730 = vld [vmem:[%s4] sm:$0xff]
    %v731 = vld [vmem:[%s4 + $0x8] sm:$0xff]
    %v732 = vld [vmem:[%s4 + $0x10] sm:$0xff]
    %v733 = vld [vmem:[%s4 + $0x18] sm:$0xff]
    %v734 = vld [vmem:[%s4 + $0x20] sm:$0xff]
    %v735 = vld [vmem:[%s4 + $0x28] sm:$0xff]
    %v736 = vld [vmem:[%s4 + $0x30] sm:$0xff]
    %v737 = vld [vmem:[%s4 + $0x38] sm:$0xff]
    %v738 = vld [vmem:[%s4 + $0x40] sm:$0xff]
    %v739 = vld [vmem:[%s4 + $0x48] sm:$0xff]
    %v740 = vld [vmem:[%s4 + $0x50] sm:$0xff]
    %v741 = vld [vmem:[%s4 + $0x58] sm:$0xff]
    %v742 = vld [vmem:[%s4 + $0x60] sm:$0xff]
    %v743 = vld [vmem:[%s4 + $0x68] sm:$0xff]
    %v744 = vld [vmem:[%s4 + $0x70] sm:$0xff]
    %v745 = vld [vmem:[%s4 + $0x78] sm:$0xff]
    %v746 = vld [vmem:[%s4 + $0x80] sm:$0xff]
    %v747 = vld [vmem:[%s4 + $0x88] sm:$0xff]
    %v748 = vld [vmem:[%s4 + $0x90] sm:$0xff]
    %v749 = vld [vmem:[%s4 + $0x98] sm:$0xff]
    %v750 = vld [vmem:[%s4 + $0xa0] sm:$0xff]
    %v751 = vld [vmem:[%s4 + $0xa8] sm:$0xff]
    %v752 = vld [vmem:[%s4 + $0xb0] sm:$0xff]
    %v753 = vld [vmem:[%s4 + $0xb8] sm:$0xff]
    %v754 = vld [vmem:[%s4 + $0xc0] sm:$0xff]
    %v755 = vld [vmem:[%s4 + $0xc8] sm:$0xff]
    %v756 = vld [vmem:[%s4 + $0xd0] sm:$0xff]
    %v757 = vld [vmem:[%s4 + $0xd8] sm:$0xff]
    %v758 = vld [vmem:[%s4 + $0xe0] sm:$0xff]
    %v759 = vld [vmem:[%s4 + $0xe8] sm:$0xff]
    %v760 = vld [vmem:[%s4 + $0xf0] sm:$0xff]
    %v761 = vld [vmem:[%s4 + $0xf8] sm:$0xff]
    %762 = vmatpush.msra.mxu0 %v745
    %763 = vmatpush.msra.mxu0 %v744
    %764 = vmatpush.msra.mxu0 %v743
    %765 = vmatpush.msra.mxu0 %v742
    %766 = vmatpush.msra.mxu0 %v741
    %767 = vmatpush.msra.mxu0 %v740
    %768 = vmatpush.msra.mxu0 %v739
    %769 = vmatpush.msra.mxu0 %v738
    %770 = vmatpush.msra.mxu0 %v737
    %771 = vmatpush.msra.mxu0 %v736
    %772 = vmatpush.msra.mxu0 %v735
    %773 = vmatpush.msra.mxu0 %v734
    %774 = vmatpush.msra.mxu0 %v733
    %775 = vmatpush.msra.mxu0 %v732
    %776 = vmatpush.msra.mxu0 %v731
    %777 = vmatpush.msra.mxu0 %v730
    %778 = vmatmul.f32.gmra.mxu0 %v440
    %v779 = vpop.f32.mrf.mxu0
    %v780 = vadd.f32 0.0, %v779
    %781 = vdwg.mxu0
    %782 = vmatpush.msra.mxu0 %v761
    %783 = vmatpush.msra.mxu0 %v760
    %784 = vmatpush.msra.mxu0 %v759
    %785 = vmatpush.msra.mxu0 %v758
    %786 = vmatpush.msra.mxu0 %v757
    %787 = vmatpush.msra.mxu0 %v756
    %788 = vmatpush.msra.mxu0 %v755
    %789 = vmatpush.msra.mxu0 %v754
    %790 = vmatpush.msra.mxu0 %v753
    %791 = vmatpush.msra.mxu0 %v752
    %792 = vmatpush.msra.mxu0 %v751
    %793 = vmatpush.msra.mxu0 %v750
    %794 = vmatpush.msra.mxu0 %v749
    %795 = vmatpush.msra.mxu0 %v748
    %796 = vmatpush.msra.mxu0 %v747
    %797 = vmatpush.msra.mxu0 %v746
    %798 = vmatmul.f32.gmra.mxu0 %v441
    %v799 = vpop.f32.mrf.mxu0
    %v800 = vadd.f32 %v780, %v799
    %801 = vdwg.mxu0
    %v802 = vld [vmem:[%s8] sm:$0xff]
    %v803 = vld [vmem:[%s8 + $0x8] sm:$0xff]
    %v804 = vld [vmem:[%s8 + $0x10] sm:$0xff]
    %v805 = vld [vmem:[%s8 + $0x18] sm:$0xff]
    %v806 = vld [vmem:[%s8 + $0x20] sm:$0xff]
    %v807 = vld [vmem:[%s8 + $0x28] sm:$0xff]
    %v808 = vld [vmem:[%s8 + $0x30] sm:$0xff]
    %v809 = vld [vmem:[%s8 + $0x38] sm:$0xff]
    %v810 = vld [vmem:[%s8 + $0x40] sm:$0xff]
    %v811 = vld [vmem:[%s8 + $0x48] sm:$0xff]
    %v812 = vld [vmem:[%s8 + $0x50] sm:$0xff]
    %v813 = vld [vmem:[%s8 + $0x58] sm:$0xff]
    %v814 = vld [vmem:[%s8 + $0x60] sm:$0xff]
    %v815 = vld [vmem:[%s8 + $0x68] sm:$0xff]
    %v816 = vld [vmem:[%s8 + $0x70] sm:$0xff]
    %v817 = vld [vmem:[%s8 + $0x78] sm:$0xff]
    %v818 = vld [vmem:[%s8 + $0x80] sm:$0xff]
    %v819 = vld [vmem:[%s8 + $0x88] sm:$0xff]
    %v820 = vld [vmem:[%s8 + $0x90] sm:$0xff]
    %v821 = vld [vmem:[%s8 + $0x98] sm:$0xff]
    %v822 = vld [vmem:[%s8 + $0xa0] sm:$0xff]
    %v823 = vld [vmem:[%s8 + $0xa8] sm:$0xff]
    %v824 = vld [vmem:[%s8 + $0xb0] sm:$0xff]
    %v825 = vld [vmem:[%s8 + $0xb8] sm:$0xff]
    %v826 = vld [vmem:[%s8 + $0xc0] sm:$0xff]
    %v827 = vld [vmem:[%s8 + $0xc8] sm:$0xff]
    %v828 = vld [vmem:[%s8 + $0xd0] sm:$0xff]
    %v829 = vld [vmem:[%s8 + $0xd8] sm:$0xff]
    %v830 = vld [vmem:[%s8 + $0xe0] sm:$0xff]
    %v831 = vld [vmem:[%s8 + $0xe8] sm:$0xff]
    %v832 = vld [vmem:[%s8 + $0xf0] sm:$0xff]
    %v833 = vld [vmem:[%s8 + $0xf8] sm:$0xff]
    %v834 = vld [vmem:[%s8 + $0x100] sm:$0xff]
    %v835 = vld [vmem:[%s8 + $0x108] sm:$0xff]
    %v836 = vld [vmem:[%s8 + $0x110] sm:$0xff]
    %v837 = vld [vmem:[%s8 + $0x118] sm:$0xff]
    %v838 = vld [vmem:[%s8 + $0x120] sm:$0xff]
    %v839 = vld [vmem:[%s8 + $0x128] sm:$0xff]
    %v840 = vld [vmem:[%s8 + $0x130] sm:$0xff]
    %v841 = vld [vmem:[%s8 + $0x138] sm:$0xff]
    %v842 = vld [vmem:[%s8 + $0x140] sm:$0xff]
    %v843 = vld [vmem:[%s8 + $0x148] sm:$0xff]
    %v844 = vld [vmem:[%s8 + $0x150] sm:$0xff]
    %v845 = vld [vmem:[%s8 + $0x158] sm:$0xff]
    %v846 = vld [vmem:[%s8 + $0x160] sm:$0xff]
    %v847 = vld [vmem:[%s8 + $0x168] sm:$0xff]
    %v848 = vld [vmem:[%s8 + $0x170] sm:$0xff]
    %v849 = vld [vmem:[%s8 + $0x178] sm:$0xff]
    %v850 = vld [vmem:[%s8 + $0x180] sm:$0xff]
    %v851 = vld [vmem:[%s8 + $0x188] sm:$0xff]
    %v852 = vld [vmem:[%s8 + $0x190] sm:$0xff]
    %v853 = vld [vmem:[%s8 + $0x198] sm:$0xff]
    %v854 = vld [vmem:[%s8 + $0x1a0] sm:$0xff]
    %v855 = vld [vmem:[%s8 + $0x1a8] sm:$0xff]
    %v856 = vld [vmem:[%s8 + $0x1b0] sm:$0xff]
    %v857 = vld [vmem:[%s8 + $0x1b8] sm:$0xff]
    %v858 = vld [vmem:[%s8 + $0x1c0] sm:$0xff]
    %v859 = vld [vmem:[%s8 + $0x1c8] sm:$0xff]
    %v860 = vld [vmem:[%s8 + $0x1d0] sm:$0xff]
    %v861 = vld [vmem:[%s8 + $0x1d8] sm:$0xff]
    %v862 = vld [vmem:[%s8 + $0x1e0] sm:$0xff]
    %v863 = vld [vmem:[%s8 + $0x1e8] sm:$0xff]
    %v864 = vld [vmem:[%s8 + $0x1f0] sm:$0xff]
    %v865 = vld [vmem:[%s8 + $0x1f8] sm:$0xff]
    %v866 = vld [vmem:[#allocation12] sm:$0xff]
    %v867 = vld [vmem:[#allocation12 + $0x8] sm:$0xff]
    %v868 = vld [vmem:[#allocation12 + $0x10] sm:$0xff]
    %v869 = vld [vmem:[#allocation12 + $0x18] sm:$0xff]
    %v870 = vld [vmem:[#allocation16] sm:$0x1]
    %v871 = vld [vmem:[#allocation18] sm:$0x1]
    %vm872 = vcmask 58368
    %v873 = vsel %vm872, %v800, 0.0
    %v874 = vrot.slane %v873, 4
    %v875 = vadd.f32 %v873, %v874
    %v876 = vrot.slane %v875, 2
    %v877 = vadd.f32 %v875, %v876
    %v878 = vrot.slane %v877, 1
    %v879 = vadd.f32 %v877, %v878
    %v880 = vmul.f32 %v879, 0.0078125
    %v881 = vmul.f32 %v608, %v608
    %v882 = vmul.f32 %v648, %v648
    %v883 = vmul.f32 %v688, %v688
    %v884 = vmul.f32 %v728, %v728
    %885 = vmatpush.msra.mxu0 %v817
    %886 = vmatpush.msra.mxu0 %v816
    %887 = vmatpush.msra.mxu0 %v815
    %888 = vmatpush.msra.mxu0 %v814
    %889 = vmatpush.msra.mxu0 %v813
    %890 = vmatpush.msra.mxu0 %v812
    %891 = vmatpush.msra.mxu0 %v811
    %892 = vmatpush.msra.mxu0 %v810
    %893 = vmatpush.msra.mxu0 %v809
    %894 = vmatpush.msra.mxu0 %v808
    %895 = vmatpush.msra.mxu0 %v807
    %896 = vmatpush.msra.mxu0 %v806
    %897 = vmatpush.msra.mxu0 %v805
    %898 = vmatpush.msra.mxu0 %v804
    %899 = vmatpush.msra.mxu0 %v803
    %900 = vmatpush.msra.mxu0 %v802
    %901 = vmatmul.f32.gmra.mxu0 %v881
    %v902 = vpop.f32.mrf.mxu0
    %v903 = vadd.f32 0.0, %v902
    %904 = vdwg.mxu0
    %905 = vmatpush.msra.mxu0 %v833
    %906 = vmatpush.msra.mxu0 %v832
    %907 = vmatpush.msra.mxu0 %v831
    %908 = vmatpush.msra.mxu0 %v830
    %909 = vmatpush.msra.mxu0 %v829
    %910 = vmatpush.msra.mxu0 %v828
    %911 = vmatpush.msra.mxu0 %v827
    %912 = vmatpush.msra.mxu0 %v826
    %913 = vmatpush.msra.mxu0 %v825
    %914 = vmatpush.msra.mxu0 %v824
    %915 = vmatpush.msra.mxu0 %v823
    %916 = vmatpush.msra.mxu0 %v822
    %917 = vmatpush.msra.mxu0 %v821
    %918 = vmatpush.msra.mxu0 %v820
    %919 = vmatpush.msra.mxu0 %v819
    %920 = vmatpush.msra.mxu0 %v818
    %921 = vmatmul.f32.gmra.mxu0 %v882
    %v922 = vpop.f32.mrf.mxu0
    %v923 = vadd.f32 %v903, %v922
    %924 = vdwg.mxu0
    %925 = vmatpush.msra.mxu0 %v849
    %926 = vmatpush.msra.mxu0 %v848
    %927 = vmatpush.msra.mxu0 %v847
    %928 = vmatpush.msra.mxu0 %v846
    %929 = vmatpush.msra.mxu0 %v845
    %930 = vmatpush.msra.mxu0 %v844
    %931 = vmatpush.msra.mxu0 %v843
    %932 = vmatpush.msra.mxu0 %v842
    %933 = vmatpush.msra.mxu0 %v841
    %934 = vmatpush.msra.mxu0 %v840
    %935 = vmatpush.msra.mxu0 %v839
    %936 = vmatpush.msra.mxu0 %v838
    %937 = vmatpush.msra.mxu0 %v837
    %938 = vmatpush.msra.mxu0 %v836
    %939 = vmatpush.msra.mxu0 %v835
    %940 = vmatpush.msra.mxu0 %v834
    %941 = vmatmul.f32.gmra.mxu0 %v883
    %v942 = vpop.f32.mrf.mxu0
    %v943 = vadd.f32 %v923, %v942
    %944 = vdwg.mxu0
    %945 = vmatpush.msra.mxu0 %v865
    %946 = vmatpush.msra.mxu0 %v864
    %947 = vmatpush.msra.mxu0 %v863
    %948 = vmatpush.msra.mxu0 %v862
    %949 = vmatpush.msra.mxu0 %v861
    %950 = vmatpush.msra.mxu0 %v860
    %951 = vmatpush.msra.mxu0 %v859
    %952 = vmatpush.msra.mxu0 %v858
    %953 = vmatpush.msra.mxu0 %v857
    %954 = vmatpush.msra.mxu0 %v856
    %955 = vmatpush.msra.mxu0 %v855
    %956 = vmatpush.msra.mxu0 %v854
    %957 = vmatpush.msra.mxu0 %v853
    %958 = vmatpush.msra.mxu0 %v852
    %959 = vmatpush.msra.mxu0 %v851
    %960 = vmatpush.msra.mxu0 %v850
    %961 = vmatmul.f32.gmra.mxu0 %v884
    %v962 = vpop.f32.mrf.mxu0
    %v963 = vadd.f32 %v943, %v962
    %964 = vdwg.mxu0
    %v965 = vsel %vm872, %v963, 0.0
    %v966 = vrot.slane %v965, 4
    %v967 = vadd.f32 %v965, %v966
    %v968 = vrot.slane %v967, 2
    %v969 = vadd.f32 %v967, %v968
    %v970 = vrot.slane %v969, 1
    %v971 = vadd.f32 %v969, %v970
    %v972 = vmul.f32 %v971, 0.0078125
    %v973 = vmul.f32 %v880, %v880
    %v974 = vsub.f32 %v972, %v973
    %v975 = vadd.f32 %v974, 1e-05
    %v976 = vrsqrt.pop %v975
    %v977 = vmul.f32 %v976, %v975
    %v978 = vmul.f32 %v977, %v976
    %v979 = vmul.f32 0.5, %v978
    %v980 = vsub.f32 1.5, %v979
    %v981 = vmul.f32 %v976, %v980
    %vm982 = vweird.f32 %v975
    %vm983 = vweird.f32 %v976
    %vm984 = vmor %vm982, %vm983
    %v985 = vsel %vm984, %v976, %v981
    %v986 = vmul.f32 %v870, %v985
    %v987 = vmul.f32 %v880, %v986
    %v988 = vsub.f32 %v871, %v987
    %v990 = vperm.slane %v988, 0
    %v992 = vsel %vm386, %v986, %v990
    %v994 = vsel %vm205, %v992, 0
    %996 = vmatpush.msra.mxu0 0.0
    %997 = vmatpush.msra.mxu0 0.0
    %998 = vmatpush.msra.mxu0 0.0
    %999 = vmatpush.msra.mxu0 0.0
    %1000 = vmatpush.msra.mxu0 0.0
    %1001 = vmatpush.msra.mxu0 0.0
    %1002 = vmatpush.msra.mxu0 0.0
    %1003 = vmatpush.msra.mxu0 0.0
    %1004 = vmatpush.msra.mxu0 0.0
    %1005 = vmatpush.msra.mxu0 0.0
    %1006 = vmatpush.msra.mxu0 0.0
    %1007 = vmatpush.msra.mxu0 0.0
    %1008 = vmatpush.msra.mxu0 0.0
    %1009 = vmatpush.msra.mxu0 0.0
    %1010 = vmatpush.msra.mxu0 0.0
    %1011 = vmatpush.msra.mxu0 %v866
    %1012 = vmatmul.f32.gmra.mxu0 %v994
    %v1013 = vpop.f32.mrf.mxu0
    %v1014 = vadd.f32 0.0, %v1013
    %1015 = vdwg.mxu0
    %1016 = vmatpush.msra.mxu0 0.0
    %1017 = vmatpush.msra.mxu0 0.0
    %1018 = vmatpush.msra.mxu0 0.0
    %1019 = vmatpush.msra.mxu0 0.0
    %1020 = vmatpush.msra.mxu0 0.0
    %1021 = vmatpush.msra.mxu0 0.0
    %1022 = vmatpush.msra.mxu0 0.0
    %1023 = vmatpush.msra.mxu0 0.0
    %1024 = vmatpush.msra.mxu0 0.0
    %1025 = vmatpush.msra.mxu0 0.0
    %1026 = vmatpush.msra.mxu0 0.0
    %1027 = vmatpush.msra.mxu0 0.0
    %1028 = vmatpush.msra.mxu0 0.0
    %1029 = vmatpush.msra.mxu0 0.0
    %1030 = vmatpush.msra.mxu0 0.0
    %1031 = vmatpush.msra.mxu0 %v867
    %1032 = vmatmul.f32.gmra.mxu0 %v994
    %v1033 = vpop.f32.mrf.mxu0
    %v1034 = vadd.f32 0.0, %v1033
    %1035 = vdwg.mxu0
    %1036 = vmatpush.msra.mxu0 0.0
    %1037 = vmatpush.msra.mxu0 0.0
    %1038 = vmatpush.msra.mxu0 0.0
    %1039 = vmatpush.msra.mxu0 0.0
    %1040 = vmatpush.msra.mxu0 0.0
    %1041 = vmatpush.msra.mxu0 0.0
    %1042 = vmatpush.msra.mxu0 0.0
    %1043 = vmatpush.msra.mxu0 0.0
    %1044 = vmatpush.msra.mxu0 0.0
    %1045 = vmatpush.msra.mxu0 0.0
    %1046 = vmatpush.msra.mxu0 0.0
    %1047 = vmatpush.msra.mxu0 0.0
    %1048 = vmatpush.msra.mxu0 0.0
    %1049 = vmatpush.msra.mxu0 0.0
    %1050 = vmatpush.msra.mxu0 0.0
    %1051 = vmatpush.msra.mxu0 %v868
    %1052 = vmatmul.f32.gmra.mxu0 %v994
    %v1053 = vpop.f32.mrf.mxu0
    %v1054 = vadd.f32 0.0, %v1053
    %1055 = vdwg.mxu0
    %1056 = vmatpush.msra.mxu0 0.0
    %1057 = vmatpush.msra.mxu0 0.0
    %1058 = vmatpush.msra.mxu0 0.0
    %1059 = vmatpush.msra.mxu0 0.0
    %1060 = vmatpush.msra.mxu0 0.0
    %1061 = vmatpush.msra.mxu0 0.0
    %1062 = vmatpush.msra.mxu0 0.0
    %1063 = vmatpush.msra.mxu0 0.0
    %1064 = vmatpush.msra.mxu0 0.0
    %1065 = vmatpush.msra.mxu0 0.0
    %1066 = vmatpush.msra.mxu0 0.0
    %1067 = vmatpush.msra.mxu0 0.0
    %1068 = vmatpush.msra.mxu0 0.0
    %1069 = vmatpush.msra.mxu0 0.0
    %1070 = vmatpush.msra.mxu0 0.0
    %1071 = vmatpush.msra.mxu0 %v869
    %1072 = vmatmul.f32.gmra.mxu0 %v994
    %v1073 = vpop.f32.mrf.mxu0
    %v1074 = vadd.f32 0.0, %v1073
    %1075 = vdwg.mxu0
    %v1076 = vperm.slane %v1014, 0
    %v1077 = vperm.slane %v1034, 0
    %v1078 = vperm.slane %v1054, 0
    %v1079 = vperm.slane %v1074, 0
    %v1080 = vmul.f32 %v608, %v1076
    %v1081 = vmul.f32 %v648, %v1077
    %v1082 = vmul.f32 %v688, %v1078
    %v1083 = vmul.f32 %v728, %v1079
    %v1084 = vperm.slane %v1014, 1
    %v1085 = vperm.slane %v1034, 1
    %v1086 = vperm.slane %v1054, 1
    %v1087 = vperm.slane %v1074, 1
    %v1088 = vadd.f32 %v1080, %v1084
    %v1089 = vadd.f32 %v1081, %v1085
    %v1090 = vadd.f32 %v1082, %v1086
    %v1091 = vadd.f32 %v1083, %v1087
    %v1092 = vmax.f32 %v1088, 0.0
    %v1093 = vmax.f32 %v1089, 0.0
    %v1094 = vmax.f32 %v1090, 0.0
    %v1095 = vmax.f32 %v1091, 0.0
    %v1096 = vld [vmem:[#allocation9] sm:$0xff]
    %v1097 = vld [vmem:[#allocation9 + $0x8] sm:$0xff]
    %v1098 = vld [vmem:[#allocation9 + $0x10] sm:$0xff]
    %v1099 = vld [vmem:[#allocation9 + $0x18] sm:$0xff]
    %v1100 = vld [vmem:[#allocation9 + $0x20] sm:$0xff]
    %v1101 = vld [vmem:[#allocation9 + $0x28] sm:$0xff]
    %v1102 = vld [vmem:[#allocation9 + $0x30] sm:$0xff]
    %v1103 = vld [vmem:[#allocation9 + $0x38] sm:$0xff]
    %v1104 = vld [vmem:[#allocation9 + $0x40] sm:$0xff]
    %v1105 = vld [vmem:[#allocation9 + $0x48] sm:$0xff]
    %v1106 = vld [vmem:[#allocation9 + $0x50] sm:$0xff]
    %v1107 = vld [vmem:[#allocation9 + $0x58] sm:$0xff]
    %v1108 = vld [vmem:[#allocation9 + $0x60] sm:$0xff]
    %v1109 = vld [vmem:[#allocation9 + $0x68] sm:$0xff]
    %v1110 = vld [vmem:[#allocation9 + $0x70] sm:$0xff]
    %v1111 = vld [vmem:[#allocation9 + $0x78] sm:$0xff]
    %v1112 = vld [vmem:[#allocation9 + $0x80] sm:$0xff]
    %v1113 = vld [vmem:[#allocation9 + $0x88] sm:$0xff]
    %v1114 = vld [vmem:[#allocation9 + $0x90] sm:$0xff]
    %v1115 = vld [vmem:[#allocation9 + $0x98] sm:$0xff]
    %v1116 = vld [vmem:[#allocation9 + $0xa0] sm:$0xff]
    %v1117 = vld [vmem:[#allocation9 + $0xa8] sm:$0xff]
    %v1118 = vld [vmem:[#allocation9 + $0xb0] sm:$0xff]
    %v1119 = vld [vmem:[#allocation9 + $0xb8] sm:$0xff]
    %v1120 = vld [vmem:[#allocation9 + $0xc0] sm:$0xff]
    %v1121 = vld [vmem:[#allocation9 + $0xc8] sm:$0xff]
    %v1122 = vld [vmem:[#allocation9 + $0xd0] sm:$0xff]
    %v1123 = vld [vmem:[#allocation9 + $0xd8] sm:$0xff]
    %v1124 = vld [vmem:[#allocation9 + $0xe0] sm:$0xff]
    %v1125 = vld [vmem:[#allocation9 + $0xe8] sm:$0xff]
    %v1126 = vld [vmem:[#allocation9 + $0xf0] sm:$0xff]
    %v1127 = vld [vmem:[#allocation9 + $0xf8] sm:$0xff]
    %v1128 = vld [vmem:[#allocation9 + $0x100] sm:$0xff]
    %v1129 = vld [vmem:[#allocation9 + $0x108] sm:$0xff]
    %v1130 = vld [vmem:[#allocation9 + $0x110] sm:$0xff]
    %v1131 = vld [vmem:[#allocation9 + $0x118] sm:$0xff]
    %v1132 = vld [vmem:[#allocation9 + $0x120] sm:$0xff]
    %v1133 = vld [vmem:[#allocation9 + $0x128] sm:$0xff]
    %v1134 = vld [vmem:[#allocation9 + $0x130] sm:$0xff]
    %v1135 = vld [vmem:[#allocation9 + $0x138] sm:$0xff]
    %v1136 = vld [vmem:[#allocation9 + $0x140] sm:$0xff]
    %v1137 = vld [vmem:[#allocation9 + $0x148] sm:$0xff]
    %v1138 = vld [vmem:[#allocation9 + $0x150] sm:$0xff]
    %v1139 = vld [vmem:[#allocation9 + $0x158] sm:$0xff]
    %v1140 = vld [vmem:[#allocation9 + $0x160] sm:$0xff]
    %v1141 = vld [vmem:[#allocation9 + $0x168] sm:$0xff]
    %v1142 = vld [vmem:[#allocation9 + $0x170] sm:$0xff]
    %v1143 = vld [vmem:[#allocation9 + $0x178] sm:$0xff]
    %v1144 = vld [vmem:[#allocation9 + $0x180] sm:$0xff]
    %v1145 = vld [vmem:[#allocation9 + $0x188] sm:$0xff]
    %v1146 = vld [vmem:[#allocation9 + $0x190] sm:$0xff]
    %v1147 = vld [vmem:[#allocation9 + $0x198] sm:$0xff]
    %v1148 = vld [vmem:[#allocation9 + $0x1a0] sm:$0xff]
    %v1149 = vld [vmem:[#allocation9 + $0x1a8] sm:$0xff]
    %v1150 = vld [vmem:[#allocation9 + $0x1b0] sm:$0xff]
    %v1151 = vld [vmem:[#allocation9 + $0x1b8] sm:$0xff]
    %v1152 = vld [vmem:[#allocation9 + $0x1c0] sm:$0xff]
    %v1153 = vld [vmem:[#allocation9 + $0x1c8] sm:$0xff]
    %v1154 = vld [vmem:[#allocation9 + $0x1d0] sm:$0xff]
    %v1155 = vld [vmem:[#allocation9 + $0x1d8] sm:$0xff]
    %v1156 = vld [vmem:[#allocation9 + $0x1e0] sm:$0xff]
    %v1157 = vld [vmem:[#allocation9 + $0x1e8] sm:$0xff]
    %v1158 = vld [vmem:[#allocation9 + $0x1f0] sm:$0xff]
    %v1159 = vld [vmem:[#allocation9 + $0x1f8] sm:$0xff]
    %v1160 = vld [vmem:[#allocation9 + $0x200] sm:$0xff]
    %v1161 = vld [vmem:[#allocation9 + $0x208] sm:$0xff]
    %v1162 = vld [vmem:[#allocation9 + $0x210] sm:$0xff]
    %v1163 = vld [vmem:[#allocation9 + $0x218] sm:$0xff]
    %v1164 = vld [vmem:[#allocation9 + $0x220] sm:$0xff]
    %v1165 = vld [vmem:[#allocation9 + $0x228] sm:$0xff]
    %v1166 = vld [vmem:[#allocation9 + $0x230] sm:$0xff]
    %v1167 = vld [vmem:[#allocation9 + $0x238] sm:$0xff]
    %v1168 = vld [vmem:[#allocation9 + $0x240] sm:$0xff]
    %v1169 = vld [vmem:[#allocation9 + $0x248] sm:$0xff]
    %v1170 = vld [vmem:[#allocation9 + $0x250] sm:$0xff]
    %v1171 = vld [vmem:[#allocation9 + $0x258] sm:$0xff]
    %v1172 = vld [vmem:[#allocation9 + $0x260] sm:$0xff]
    %v1173 = vld [vmem:[#allocation9 + $0x268] sm:$0xff]
    %v1174 = vld [vmem:[#allocation9 + $0x270] sm:$0xff]
    %v1175 = vld [vmem:[#allocation9 + $0x278] sm:$0xff]
    %v1176 = vld [vmem:[#allocation9 + $0x280] sm:$0xff]
    %v1177 = vld [vmem:[#allocation9 + $0x288] sm:$0xff]
    %v1178 = vld [vmem:[#allocation9 + $0x290] sm:$0xff]
    %v1179 = vld [vmem:[#allocation9 + $0x298] sm:$0xff]
    %v1180 = vld [vmem:[#allocation9 + $0x2a0] sm:$0xff]
    %v1181 = vld [vmem:[#allocation9 + $0x2a8] sm:$0xff]
    %v1182 = vld [vmem:[#allocation9 + $0x2b0] sm:$0xff]
    %v1183 = vld [vmem:[#allocation9 + $0x2b8] sm:$0xff]
    %v1184 = vld [vmem:[#allocation9 + $0x2c0] sm:$0xff]
    %v1185 = vld [vmem:[#allocation9 + $0x2c8] sm:$0xff]
    %v1186 = vld [vmem:[#allocation9 + $0x2d0] sm:$0xff]
    %v1187 = vld [vmem:[#allocation9 + $0x2d8] sm:$0xff]
    %v1188 = vld [vmem:[#allocation9 + $0x2e0] sm:$0xff]
    %v1189 = vld [vmem:[#allocation9 + $0x2e8] sm:$0xff]
    %v1190 = vld [vmem:[#allocation9 + $0x2f0] sm:$0xff]
    %v1191 = vld [vmem:[#allocation9 + $0x2f8] sm:$0xff]
    %v1192 = vld [vmem:[#allocation9 + $0x300] sm:$0xff]
    %v1193 = vld [vmem:[#allocation9 + $0x308] sm:$0xff]
    %v1194 = vld [vmem:[#allocation9 + $0x310] sm:$0xff]
    %v1195 = vld [vmem:[#allocation9 + $0x318] sm:$0xff]
    %v1196 = vld [vmem:[#allocation9 + $0x320] sm:$0xff]
    %v1197 = vld [vmem:[#allocation9 + $0x328] sm:$0xff]
    %v1198 = vld [vmem:[#allocation9 + $0x330] sm:$0xff]
    %v1199 = vld [vmem:[#allocation9 + $0x338] sm:$0xff]
    %v1200 = vld [vmem:[#allocation9 + $0x340] sm:$0xff]
    %v1201 = vld [vmem:[#allocation9 + $0x348] sm:$0xff]
    %v1202 = vld [vmem:[#allocation9 + $0x350] sm:$0xff]
    %v1203 = vld [vmem:[#allocation9 + $0x358] sm:$0xff]
    %v1204 = vld [vmem:[#allocation9 + $0x360] sm:$0xff]
    %v1205 = vld [vmem:[#allocation9 + $0x368] sm:$0xff]
    %v1206 = vld [vmem:[#allocation9 + $0x370] sm:$0xff]
    %v1207 = vld [vmem:[#allocation9 + $0x378] sm:$0xff]
    %v1208 = vld [vmem:[#allocation9 + $0x380] sm:$0xff]
    %v1209 = vld [vmem:[#allocation9 + $0x388] sm:$0xff]
    %v1210 = vld [vmem:[#allocation9 + $0x390] sm:$0xff]
    %v1211 = vld [vmem:[#allocation9 + $0x398] sm:$0xff]
    %v1212 = vld [vmem:[#allocation9 + $0x3a0] sm:$0xff]
    %v1213 = vld [vmem:[#allocation9 + $0x3a8] sm:$0xff]
    %v1214 = vld [vmem:[#allocation9 + $0x3b0] sm:$0xff]
    %v1215 = vld [vmem:[#allocation9 + $0x3b8] sm:$0xff]
    %v1216 = vld [vmem:[#allocation9 + $0x3c0] sm:$0xff]
    %v1217 = vld [vmem:[#allocation9 + $0x3c8] sm:$0xff]
    %v1218 = vld [vmem:[#allocation9 + $0x3d0] sm:$0xff]
    %v1219 = vld [vmem:[#allocation9 + $0x3d8] sm:$0xff]
    %v1220 = vld [vmem:[#allocation9 + $0x3e0] sm:$0xff]
    %v1221 = vld [vmem:[#allocation9 + $0x3e8] sm:$0xff]
    %v1222 = vld [vmem:[#allocation9 + $0x3f0] sm:$0xff]
    %v1223 = vld [vmem:[#allocation9 + $0x3f8] sm:$0xff]
    %v1224 = vld [vmem:[#allocation9 + $0x400] sm:$0xff]
    %v1225 = vld [vmem:[#allocation9 + $0x408] sm:$0xff]
    %v1226 = vld [vmem:[#allocation9 + $0x410] sm:$0xff]
    %v1227 = vld [vmem:[#allocation9 + $0x418] sm:$0xff]
    %v1228 = vld [vmem:[#allocation9 + $0x420] sm:$0xff]
    %v1229 = vld [vmem:[#allocation9 + $0x428] sm:$0xff]
    %v1230 = vld [vmem:[#allocation9 + $0x430] sm:$0xff]
    %v1231 = vld [vmem:[#allocation9 + $0x438] sm:$0xff]
    %v1232 = vld [vmem:[#allocation9 + $0x440] sm:$0xff]
    %v1233 = vld [vmem:[#allocation9 + $0x448] sm:$0xff]
    %v1234 = vld [vmem:[#allocation9 + $0x450] sm:$0xff]
    %v1235 = vld [vmem:[#allocation9 + $0x458] sm:$0xff]
    %v1236 = vld [vmem:[#allocation9 + $0x460] sm:$0xff]
    %v1237 = vld [vmem:[#allocation9 + $0x468] sm:$0xff]
    %v1238 = vld [vmem:[#allocation9 + $0x470] sm:$0xff]
    %v1239 = vld [vmem:[#allocation9 + $0x478] sm:$0xff]
    %v1240 = vld [vmem:[#allocation9 + $0x480] sm:$0xff]
    %v1241 = vld [vmem:[#allocation9 + $0x488] sm:$0xff]
    %v1242 = vld [vmem:[#allocation9 + $0x490] sm:$0xff]
    %v1243 = vld [vmem:[#allocation9 + $0x498] sm:$0xff]
    %v1244 = vld [vmem:[#allocation9 + $0x4a0] sm:$0xff]
    %v1245 = vld [vmem:[#allocation9 + $0x4a8] sm:$0xff]
    %v1246 = vld [vmem:[#allocation9 + $0x4b0] sm:$0xff]
    %v1247 = vld [vmem:[#allocation9 + $0x4b8] sm:$0xff]
    %v1248 = vld [vmem:[#allocation9 + $0x4c0] sm:$0xff]
    %v1249 = vld [vmem:[#allocation9 + $0x4c8] sm:$0xff]
    %v1250 = vld [vmem:[#allocation9 + $0x4d0] sm:$0xff]
    %v1251 = vld [vmem:[#allocation9 + $0x4d8] sm:$0xff]
    %v1252 = vld [vmem:[#allocation9 + $0x4e0] sm:$0xff]
    %v1253 = vld [vmem:[#allocation9 + $0x4e8] sm:$0xff]
    %v1254 = vld [vmem:[#allocation9 + $0x4f0] sm:$0xff]
    %v1255 = vld [vmem:[#allocation9 + $0x4f8] sm:$0xff]
    %v1256 = vld [vmem:[#allocation9 + $0x500] sm:$0xff]
    %v1257 = vld [vmem:[#allocation9 + $0x508] sm:$0xff]
    %v1258 = vld [vmem:[#allocation9 + $0x510] sm:$0xff]
    %v1259 = vld [vmem:[#allocation9 + $0x518] sm:$0xff]
    %v1260 = vld [vmem:[#allocation9 + $0x520] sm:$0xff]
    %v1261 = vld [vmem:[#allocation9 + $0x528] sm:$0xff]
    %v1262 = vld [vmem:[#allocation9 + $0x530] sm:$0xff]
    %v1263 = vld [vmem:[#allocation9 + $0x538] sm:$0xff]
    %v1264 = vld [vmem:[#allocation9 + $0x540] sm:$0xff]
    %v1265 = vld [vmem:[#allocation9 + $0x548] sm:$0xff]
    %v1266 = vld [vmem:[#allocation9 + $0x550] sm:$0xff]
    %v1267 = vld [vmem:[#allocation9 + $0x558] sm:$0xff]
    %v1268 = vld [vmem:[#allocation9 + $0x560] sm:$0xff]
    %v1269 = vld [vmem:[#allocation9 + $0x568] sm:$0xff]
    %v1270 = vld [vmem:[#allocation9 + $0x570] sm:$0xff]
    %v1271 = vld [vmem:[#allocation9 + $0x578] sm:$0xff]
    %v1272 = vld [vmem:[#allocation9 + $0x580] sm:$0xff]
    %v1273 = vld [vmem:[#allocation9 + $0x588] sm:$0xff]
    %v1274 = vld [vmem:[#allocation9 + $0x590] sm:$0xff]
    %v1275 = vld [vmem:[#allocation9 + $0x598] sm:$0xff]
    %v1276 = vld [vmem:[#allocation9 + $0x5a0] sm:$0xff]
    %v1277 = vld [vmem:[#allocation9 + $0x5a8] sm:$0xff]
    %v1278 = vld [vmem:[#allocation9 + $0x5b0] sm:$0xff]
    %v1279 = vld [vmem:[#allocation9 + $0x5b8] sm:$0xff]
    %v1280 = vld [vmem:[#allocation9 + $0x5c0] sm:$0xff]
    %v1281 = vld [vmem:[#allocation9 + $0x5c8] sm:$0xff]
    %v1282 = vld [vmem:[#allocation9 + $0x5d0] sm:$0xff]
    %v1283 = vld [vmem:[#allocation9 + $0x5d8] sm:$0xff]
    %v1284 = vld [vmem:[#allocation9 + $0x5e0] sm:$0xff]
    %v1285 = vld [vmem:[#allocation9 + $0x5e8] sm:$0xff]
    %v1286 = vld [vmem:[#allocation9 + $0x5f0] sm:$0xff]
    %v1287 = vld [vmem:[#allocation9 + $0x5f8] sm:$0xff]
    %v1288 = vld [vmem:[#allocation9 + $0x600] sm:$0xff]
    %v1289 = vld [vmem:[#allocation9 + $0x608] sm:$0xff]
    %v1290 = vld [vmem:[#allocation9 + $0x610] sm:$0xff]
    %v1291 = vld [vmem:[#allocation9 + $0x618] sm:$0xff]
    %v1292 = vld [vmem:[#allocation9 + $0x620] sm:$0xff]
    %v1293 = vld [vmem:[#allocation9 + $0x628] sm:$0xff]
    %v1294 = vld [vmem:[#allocation9 + $0x630] sm:$0xff]
    %v1295 = vld [vmem:[#allocation9 + $0x638] sm:$0xff]
    %v1296 = vld [vmem:[#allocation9 + $0x640] sm:$0xff]
    %v1297 = vld [vmem:[#allocation9 + $0x648] sm:$0xff]
    %v1298 = vld [vmem:[#allocation9 + $0x650] sm:$0xff]
    %v1299 = vld [vmem:[#allocation9 + $0x658] sm:$0xff]
    %v1300 = vld [vmem:[#allocation9 + $0x660] sm:$0xff]
    %v1301 = vld [vmem:[#allocation9 + $0x668] sm:$0xff]
    %v1302 = vld [vmem:[#allocation9 + $0x670] sm:$0xff]
    %v1303 = vld [vmem:[#allocation9 + $0x678] sm:$0xff]
    %v1304 = vld [vmem:[#allocation9 + $0x680] sm:$0xff]
    %v1305 = vld [vmem:[#allocation9 + $0x688] sm:$0xff]
    %v1306 = vld [vmem:[#allocation9 + $0x690] sm:$0xff]
    %v1307 = vld [vmem:[#allocation9 + $0x698] sm:$0xff]
    %v1308 = vld [vmem:[#allocation9 + $0x6a0] sm:$0xff]
    %v1309 = vld [vmem:[#allocation9 + $0x6a8] sm:$0xff]
    %v1310 = vld [vmem:[#allocation9 + $0x6b0] sm:$0xff]
    %v1311 = vld [vmem:[#allocation9 + $0x6b8] sm:$0xff]
    %v1312 = vld [vmem:[#allocation9 + $0x6c0] sm:$0xff]
    %v1313 = vld [vmem:[#allocation9 + $0x6c8] sm:$0xff]
    %v1314 = vld [vmem:[#allocation9 + $0x6d0] sm:$0xff]
    %v1315 = vld [vmem:[#allocation9 + $0x6d8] sm:$0xff]
    %v1316 = vld [vmem:[#allocation9 + $0x6e0] sm:$0xff]
    %v1317 = vld [vmem:[#allocation9 + $0x6e8] sm:$0xff]
    %v1318 = vld [vmem:[#allocation9 + $0x6f0] sm:$0xff]
    %v1319 = vld [vmem:[#allocation9 + $0x6f8] sm:$0xff]
    %v1320 = vld [vmem:[#allocation9 + $0x700] sm:$0xff]
    %v1321 = vld [vmem:[#allocation9 + $0x708] sm:$0xff]
    %v1322 = vld [vmem:[#allocation9 + $0x710] sm:$0xff]
    %v1323 = vld [vmem:[#allocation9 + $0x718] sm:$0xff]
    %v1324 = vld [vmem:[#allocation9 + $0x720] sm:$0xff]
    %v1325 = vld [vmem:[#allocation9 + $0x728] sm:$0xff]
    %v1326 = vld [vmem:[#allocation9 + $0x730] sm:$0xff]
    %v1327 = vld [vmem:[#allocation9 + $0x738] sm:$0xff]
    %v1328 = vld [vmem:[#allocation9 + $0x740] sm:$0xff]
    %v1329 = vld [vmem:[#allocation9 + $0x748] sm:$0xff]
    %v1330 = vld [vmem:[#allocation9 + $0x750] sm:$0xff]
    %v1331 = vld [vmem:[#allocation9 + $0x758] sm:$0xff]
    %v1332 = vld [vmem:[#allocation9 + $0x760] sm:$0xff]
    %v1333 = vld [vmem:[#allocation9 + $0x768] sm:$0xff]
    %v1334 = vld [vmem:[#allocation9 + $0x770] sm:$0xff]
    %v1335 = vld [vmem:[#allocation9 + $0x778] sm:$0xff]
    %v1336 = vld [vmem:[#allocation9 + $0x780] sm:$0xff]
    %v1337 = vld [vmem:[#allocation9 + $0x788] sm:$0xff]
    %v1338 = vld [vmem:[#allocation9 + $0x790] sm:$0xff]
    %v1339 = vld [vmem:[#allocation9 + $0x798] sm:$0xff]
    %v1340 = vld [vmem:[#allocation9 + $0x7a0] sm:$0xff]
    %v1341 = vld [vmem:[#allocation9 + $0x7a8] sm:$0xff]
    %v1342 = vld [vmem:[#allocation9 + $0x7b0] sm:$0xff]
    %v1343 = vld [vmem:[#allocation9 + $0x7b8] sm:$0xff]
    %v1344 = vld [vmem:[#allocation9 + $0x7c0] sm:$0xff]
    %v1345 = vld [vmem:[#allocation9 + $0x7c8] sm:$0xff]
    %v1346 = vld [vmem:[#allocation9 + $0x7d0] sm:$0xff]
    %v1347 = vld [vmem:[#allocation9 + $0x7d8] sm:$0xff]
    %v1348 = vld [vmem:[#allocation9 + $0x7e0] sm:$0xff]
    %v1349 = vld [vmem:[#allocation9 + $0x7e8] sm:$0xff]
    %v1350 = vld [vmem:[#allocation9 + $0x7f0] sm:$0xff]
    %v1351 = vld [vmem:[#allocation9 + $0x7f8] sm:$0xff]
    %v1352 = vld [vmem:[#allocation9 + $0x800] sm:$0xff]
    %v1353 = vld [vmem:[#allocation9 + $0x808] sm:$0xff]
    %v1354 = vld [vmem:[#allocation9 + $0x810] sm:$0xff]
    %v1355 = vld [vmem:[#allocation9 + $0x818] sm:$0xff]
    %v1356 = vld [vmem:[#allocation9 + $0x820] sm:$0xff]
    %v1357 = vld [vmem:[#allocation9 + $0x828] sm:$0xff]
    %v1358 = vld [vmem:[#allocation9 + $0x830] sm:$0xff]
    %v1359 = vld [vmem:[#allocation9 + $0x838] sm:$0xff]
    %v1360 = vld [vmem:[#allocation9 + $0x840] sm:$0xff]
    %v1361 = vld [vmem:[#allocation9 + $0x848] sm:$0xff]
    %v1362 = vld [vmem:[#allocation9 + $0x850] sm:$0xff]
    %v1363 = vld [vmem:[#allocation9 + $0x858] sm:$0xff]
    %v1364 = vld [vmem:[#allocation9 + $0x860] sm:$0xff]
    %v1365 = vld [vmem:[#allocation9 + $0x868] sm:$0xff]
    %v1366 = vld [vmem:[#allocation9 + $0x870] sm:$0xff]
    %v1367 = vld [vmem:[#allocation9 + $0x878] sm:$0xff]
    %v1368 = vld [vmem:[#allocation9 + $0x880] sm:$0xff]
    %v1369 = vld [vmem:[#allocation9 + $0x888] sm:$0xff]
    %v1370 = vld [vmem:[#allocation9 + $0x890] sm:$0xff]
    %v1371 = vld [vmem:[#allocation9 + $0x898] sm:$0xff]
    %v1372 = vld [vmem:[#allocation9 + $0x8a0] sm:$0xff]
    %v1373 = vld [vmem:[#allocation9 + $0x8a8] sm:$0xff]
    %v1374 = vld [vmem:[#allocation9 + $0x8b0] sm:$0xff]
    %v1375 = vld [vmem:[#allocation9 + $0x8b8] sm:$0xff]
    %v1376 = vld [vmem:[#allocation9 + $0x8c0] sm:$0xff]
    %v1377 = vld [vmem:[#allocation9 + $0x8c8] sm:$0xff]
    %v1378 = vld [vmem:[#allocation9 + $0x8d0] sm:$0xff]
    %v1379 = vld [vmem:[#allocation9 + $0x8d8] sm:$0xff]
    %v1380 = vld [vmem:[#allocation9 + $0x8e0] sm:$0xff]
    %v1381 = vld [vmem:[#allocation9 + $0x8e8] sm:$0xff]
    %v1382 = vld [vmem:[#allocation9 + $0x8f0] sm:$0xff]
    %v1383 = vld [vmem:[#allocation9 + $0x8f8] sm:$0xff]
    %v1384 = vld [vmem:[#allocation9 + $0x900] sm:$0xff]
    %v1385 = vld [vmem:[#allocation9 + $0x908] sm:$0xff]
    %v1386 = vld [vmem:[#allocation9 + $0x910] sm:$0xff]
    %v1387 = vld [vmem:[#allocation9 + $0x918] sm:$0xff]
    %v1388 = vld [vmem:[#allocation9 + $0x920] sm:$0xff]
    %v1389 = vld [vmem:[#allocation9 + $0x928] sm:$0xff]
    %v1390 = vld [vmem:[#allocation9 + $0x930] sm:$0xff]
    %v1391 = vld [vmem:[#allocation9 + $0x938] sm:$0xff]
    %v1392 = vld [vmem:[#allocation9 + $0x940] sm:$0xff]
    %v1393 = vld [vmem:[#allocation9 + $0x948] sm:$0xff]
    %v1394 = vld [vmem:[#allocation9 + $0x950] sm:$0xff]
    %v1395 = vld [vmem:[#allocation9 + $0x958] sm:$0xff]
    %v1396 = vld [vmem:[#allocation9 + $0x960] sm:$0xff]
    %v1397 = vld [vmem:[#allocation9 + $0x968] sm:$0xff]
    %v1398 = vld [vmem:[#allocation9 + $0x970] sm:$0xff]
    %v1399 = vld [vmem:[#allocation9 + $0x978] sm:$0xff]
    %v1400 = vld [vmem:[#allocation9 + $0x980] sm:$0xff]
    %v1401 = vld [vmem:[#allocation9 + $0x988] sm:$0xff]
    %v1402 = vld [vmem:[#allocation9 + $0x990] sm:$0xff]
    %v1403 = vld [vmem:[#allocation9 + $0x998] sm:$0xff]
    %v1404 = vld [vmem:[#allocation9 + $0x9a0] sm:$0xff]
    %v1405 = vld [vmem:[#allocation9 + $0x9a8] sm:$0xff]
    %v1406 = vld [vmem:[#allocation9 + $0x9b0] sm:$0xff]
    %v1407 = vld [vmem:[#allocation9 + $0x9b8] sm:$0xff]
    %v1408 = vld [vmem:[#allocation9 + $0x9c0] sm:$0xff]
    %v1409 = vld [vmem:[#allocation9 + $0x9c8] sm:$0xff]
    %v1410 = vld [vmem:[#allocation9 + $0x9d0] sm:$0xff]
    %v1411 = vld [vmem:[#allocation9 + $0x9d8] sm:$0xff]
    %v1412 = vld [vmem:[#allocation9 + $0x9e0] sm:$0xff]
    %v1413 = vld [vmem:[#allocation9 + $0x9e8] sm:$0xff]
    %v1414 = vld [vmem:[#allocation9 + $0x9f0] sm:$0xff]
    %v1415 = vld [vmem:[#allocation9 + $0x9f8] sm:$0xff]
    %v1416 = vld [vmem:[#allocation9 + $0xa00] sm:$0xff]
    %v1417 = vld [vmem:[#allocation9 + $0xa08] sm:$0xff]
    %v1418 = vld [vmem:[#allocation9 + $0xa10] sm:$0xff]
    %v1419 = vld [vmem:[#allocation9 + $0xa18] sm:$0xff]
    %v1420 = vld [vmem:[#allocation9 + $0xa20] sm:$0xff]
    %v1421 = vld [vmem:[#allocation9 + $0xa28] sm:$0xff]
    %v1422 = vld [vmem:[#allocation9 + $0xa30] sm:$0xff]
    %v1423 = vld [vmem:[#allocation9 + $0xa38] sm:$0xff]
    %v1424 = vld [vmem:[#allocation9 + $0xa40] sm:$0xff]
    %v1425 = vld [vmem:[#allocation9 + $0xa48] sm:$0xff]
    %v1426 = vld [vmem:[#allocation9 + $0xa50] sm:$0xff]
    %v1427 = vld [vmem:[#allocation9 + $0xa58] sm:$0xff]
    %v1428 = vld [vmem:[#allocation9 + $0xa60] sm:$0xff]
    %v1429 = vld [vmem:[#allocation9 + $0xa68] sm:$0xff]
    %v1430 = vld [vmem:[#allocation9 + $0xa70] sm:$0xff]
    %v1431 = vld [vmem:[#allocation9 + $0xa78] sm:$0xff]
    %v1432 = vld [vmem:[#allocation9 + $0xa80] sm:$0xff]
    %v1433 = vld [vmem:[#allocation9 + $0xa88] sm:$0xff]
    %v1434 = vld [vmem:[#allocation9 + $0xa90] sm:$0xff]
    %v1435 = vld [vmem:[#allocation9 + $0xa98] sm:$0xff]
    %v1436 = vld [vmem:[#allocation9 + $0xaa0] sm:$0xff]
    %v1437 = vld [vmem:[#allocation9 + $0xaa8] sm:$0xff]
    %v1438 = vld [vmem:[#allocation9 + $0xab0] sm:$0xff]
    %v1439 = vld [vmem:[#allocation9 + $0xab8] sm:$0xff]
    %v1440 = vld [vmem:[#allocation9 + $0xac0] sm:$0xff]
    %v1441 = vld [vmem:[#allocation9 + $0xac8] sm:$0xff]
    %v1442 = vld [vmem:[#allocation9 + $0xad0] sm:$0xff]
    %v1443 = vld [vmem:[#allocation9 + $0xad8] sm:$0xff]
    %v1444 = vld [vmem:[#allocation9 + $0xae0] sm:$0xff]
    %v1445 = vld [vmem:[#allocation9 + $0xae8] sm:$0xff]
    %v1446 = vld [vmem:[#allocation9 + $0xaf0] sm:$0xff]
    %v1447 = vld [vmem:[#allocation9 + $0xaf8] sm:$0xff]
    %v1448 = vld [vmem:[#allocation9 + $0xb00] sm:$0xff]
    %v1449 = vld [vmem:[#allocation9 + $0xb08] sm:$0xff]
    %v1450 = vld [vmem:[#allocation9 + $0xb10] sm:$0xff]
    %v1451 = vld [vmem:[#allocation9 + $0xb18] sm:$0xff]
    %v1452 = vld [vmem:[#allocation9 + $0xb20] sm:$0xff]
    %v1453 = vld [vmem:[#allocation9 + $0xb28] sm:$0xff]
    %v1454 = vld [vmem:[#allocation9 + $0xb30] sm:$0xff]
    %v1455 = vld [vmem:[#allocation9 + $0xb38] sm:$0xff]
    %v1456 = vld [vmem:[#allocation9 + $0xb40] sm:$0xff]
    %v1457 = vld [vmem:[#allocation9 + $0xb48] sm:$0xff]
    %v1458 = vld [vmem:[#allocation9 + $0xb50] sm:$0xff]
    %v1459 = vld [vmem:[#allocation9 + $0xb58] sm:$0xff]
    %v1460 = vld [vmem:[#allocation9 + $0xb60] sm:$0xff]
    %v1461 = vld [vmem:[#allocation9 + $0xb68] sm:$0xff]
    %v1462 = vld [vmem:[#allocation9 + $0xb70] sm:$0xff]
    %v1463 = vld [vmem:[#allocation9 + $0xb78] sm:$0xff]
    %v1464 = vld [vmem:[#allocation9 + $0xb80] sm:$0xff]
    %v1465 = vld [vmem:[#allocation9 + $0xb88] sm:$0xff]
    %v1466 = vld [vmem:[#allocation9 + $0xb90] sm:$0xff]
    %v1467 = vld [vmem:[#allocation9 + $0xb98] sm:$0xff]
    %v1468 = vld [vmem:[#allocation9 + $0xba0] sm:$0xff]
    %v1469 = vld [vmem:[#allocation9 + $0xba8] sm:$0xff]
    %v1470 = vld [vmem:[#allocation9 + $0xbb0] sm:$0xff]
    %v1471 = vld [vmem:[#allocation9 + $0xbb8] sm:$0xff]
    %v1472 = vld [vmem:[#allocation9 + $0xbc0] sm:$0xff]
    %v1473 = vld [vmem:[#allocation9 + $0xbc8] sm:$0xff]
    %v1474 = vld [vmem:[#allocation9 + $0xbd0] sm:$0xff]
    %v1475 = vld [vmem:[#allocation9 + $0xbd8] sm:$0xff]
    %v1476 = vld [vmem:[#allocation9 + $0xbe0] sm:$0xff]
    %v1477 = vld [vmem:[#allocation9 + $0xbe8] sm:$0xff]
    %v1478 = vld [vmem:[#allocation9 + $0xbf0] sm:$0xff]
    %v1479 = vld [vmem:[#allocation9 + $0xbf8] sm:$0xff]
    %1480 = vmatpush.msra.mxu0 %v1186
    %1481 = vmatpush.msra.mxu0 %v1180
    %1482 = vmatpush.msra.mxu0 %v1174
    %1483 = vmatpush.msra.mxu0 %v1168
    %1484 = vmatpush.msra.mxu0 %v1162
    %1485 = vmatpush.msra.mxu0 %v1156
    %1486 = vmatpush.msra.mxu0 %v1150
    %1487 = vmatpush.msra.mxu0 %v1144
    %1488 = vmatpush.msra.mxu0 %v1138
    %1489 = vmatpush.msra.mxu0 %v1132
    %1490 = vmatpush.msra.mxu0 %v1126
    %1491 = vmatpush.msra.mxu0 %v1120
    %1492 = vmatpush.msra.mxu0 %v1114
    %1493 = vmatpush.msra.mxu0 %v1108
    %1494 = vmatpush.msra.mxu0 %v1102
    %1495 = vmatpush.msra.mxu0 %v1096
    %1496 = vmatmul.f32.gmra.mxu0 %v1092
    %v1497 = vpop.f32.mrf.mxu0
    %v1498 = vadd.f32 0.0, %v1497
    %1499 = vdwg.mxu0
    %1500 = vmatpush.msra.mxu0 %v1282
    %1501 = vmatpush.msra.mxu0 %v1276
    %1502 = vmatpush.msra.mxu0 %v1270
    %1503 = vmatpush.msra.mxu0 %v1264
    %1504 = vmatpush.msra.mxu0 %v1258
    %1505 = vmatpush.msra.mxu0 %v1252
    %1506 = vmatpush.msra.mxu0 %v1246
    %1507 = vmatpush.msra.mxu0 %v1240
    %1508 = vmatpush.msra.mxu0 %v1234
    %1509 = vmatpush.msra.mxu0 %v1228
    %1510 = vmatpush.msra.mxu0 %v1222
    %1511 = vmatpush.msra.mxu0 %v1216
    %1512 = vmatpush.msra.mxu0 %v1210
    %1513 = vmatpush.msra.mxu0 %v1204
    %1514 = vmatpush.msra.mxu0 %v1198
    %1515 = vmatpush.msra.mxu0 %v1192
    %1516 = vmatmul.f32.gmra.mxu0 %v1093
    %v1517 = vpop.f32.mrf.mxu0
    %v1518 = vadd.f32 %v1498, %v1517
    %1519 = vdwg.mxu0
    %1520 = vmatpush.msra.mxu0 %v1378
    %1521 = vmatpush.msra.mxu0 %v1372
    %1522 = vmatpush.msra.mxu0 %v1366
    %1523 = vmatpush.msra.mxu0 %v1360
    %1524 = vmatpush.msra.mxu0 %v1354
    %1525 = vmatpush.msra.mxu0 %v1348
    %1526 = vmatpush.msra.mxu0 %v1342
    %1527 = vmatpush.msra.mxu0 %v1336
    %1528 = vmatpush.msra.mxu0 %v1330
    %1529 = vmatpush.msra.mxu0 %v1324
    %1530 = vmatpush.msra.mxu0 %v1318
    %1531 = vmatpush.msra.mxu0 %v1312
    %1532 = vmatpush.msra.mxu0 %v1306
    %1533 = vmatpush.msra.mxu0 %v1300
    %1534 = vmatpush.msra.mxu0 %v1294
    %1535 = vmatpush.msra.mxu0 %v1288
    %1536 = vmatmul.f32.gmra.mxu0 %v1094
    %v1537 = vpop.f32.mrf.mxu0
    %v1538 = vadd.f32 %v1518, %v1537
    %1539 = vdwg.mxu0
    %1540 = vmatpush.msra.mxu0 %v1474
    %1541 = vmatpush.msra.mxu0 %v1468
    %1542 = vmatpush.msra.mxu0 %v1462
    %1543 = vmatpush.msra.mxu0 %v1456
    %1544 = vmatpush.msra.mxu0 %v1450
    %1545 = vmatpush.msra.mxu0 %v1444
    %1546 = vmatpush.msra.mxu0 %v1438
    %1547 = vmatpush.msra.mxu0 %v1432
    %1548 = vmatpush.msra.mxu0 %v1426
    %1549 = vmatpush.msra.mxu0 %v1420
    %1550 = vmatpush.msra.mxu0 %v1414
    %1551 = vmatpush.msra.mxu0 %v1408
    %1552 = vmatpush.msra.mxu0 %v1402
    %1553 = vmatpush.msra.mxu0 %v1396
    %1554 = vmatpush.msra.mxu0 %v1390
    %1555 = vmatpush.msra.mxu0 %v1384
    %1556 = vmatmul.f32.gmra.mxu0 %v1095
    %v1557 = vpop.f32.mrf.mxu0
    %v1558 = vadd.f32 %v1538, %v1557
    %1559 = vdwg.mxu0
    %1560 = vmatpush.msra.mxu0 %v1187
    %1561 = vmatpush.msra.mxu0 %v1181
    %1562 = vmatpush.msra.mxu0 %v1175
    %1563 = vmatpush.msra.mxu0 %v1169
    %1564 = vmatpush.msra.mxu0 %v1163
    %1565 = vmatpush.msra.mxu0 %v1157
    %1566 = vmatpush.msra.mxu0 %v1151
    %1567 = vmatpush.msra.mxu0 %v1145
    %1568 = vmatpush.msra.mxu0 %v1139
    %1569 = vmatpush.msra.mxu0 %v1133
    %1570 = vmatpush.msra.mxu0 %v1127
    %1571 = vmatpush.msra.mxu0 %v1121
    %1572 = vmatpush.msra.mxu0 %v1115
    %1573 = vmatpush.msra.mxu0 %v1109
    %1574 = vmatpush.msra.mxu0 %v1103
    %1575 = vmatpush.msra.mxu0 %v1097
    %1576 = vmatmul.f32.gmra.mxu0 %v1092
    %v1577 = vpop.f32.mrf.mxu0
    %v1578 = vadd.f32 0.0, %v1577
    %1579 = vdwg.mxu0
    %1580 = vmatpush.msra.mxu0 %v1283
    %1581 = vmatpush.msra.mxu0 %v1277
    %1582 = vmatpush.msra.mxu0 %v1271
    %1583 = vmatpush.msra.mxu0 %v1265
    %1584 = vmatpush.msra.mxu0 %v1259
    %1585 = vmatpush.msra.mxu0 %v1253
    %1586 = vmatpush.msra.mxu0 %v1247
    %1587 = vmatpush.msra.mxu0 %v1241
    %1588 = vmatpush.msra.mxu0 %v1235
    %1589 = vmatpush.msra.mxu0 %v1229
    %1590 = vmatpush.msra.mxu0 %v1223
    %1591 = vmatpush.msra.mxu0 %v1217
    %1592 = vmatpush.msra.mxu0 %v1211
    %1593 = vmatpush.msra.mxu0 %v1205
    %1594 = vmatpush.msra.mxu0 %v1199
    %1595 = vmatpush.msra.mxu0 %v1193
    %1596 = vmatmul.f32.gmra.mxu0 %v1093
    %v1597 = vpop.f32.mrf.mxu0
    %v1598 = vadd.f32 %v1578, %v1597
    %1599 = vdwg.mxu0
    %1600 = vmatpush.msra.mxu0 %v1379
    %1601 = vmatpush.msra.mxu0 %v1373
    %1602 = vmatpush.msra.mxu0 %v1367
    %1603 = vmatpush.msra.mxu0 %v1361
    %1604 = vmatpush.msra.mxu0 %v1355
    %1605 = vmatpush.msra.mxu0 %v1349
    %1606 = vmatpush.msra.mxu0 %v1343
    %1607 = vmatpush.msra.mxu0 %v1337
    %1608 = vmatpush.msra.mxu0 %v1331
    %1609 = vmatpush.msra.mxu0 %v1325
    %1610 = vmatpush.msra.mxu0 %v1319
    %1611 = vmatpush.msra.mxu0 %v1313
    %1612 = vmatpush.msra.mxu0 %v1307
    %1613 = vmatpush.msra.mxu0 %v1301
    %1614 = vmatpush.msra.mxu0 %v1295
    %1615 = vmatpush.msra.mxu0 %v1289
    %1616 = vmatmul.f32.gmra.mxu0 %v1094
    %v1617 = vpop.f32.mrf.mxu0
    %v1618 = vadd.f32 %v1598, %v1617
    %1619 = vdwg.mxu0
    %1620 = vmatpush.msra.mxu0 %v1475
    %1621 = vmatpush.msra.mxu0 %v1469
    %1622 = vmatpush.msra.mxu0 %v1463
    %1623 = vmatpush.msra.mxu0 %v1457
    %1624 = vmatpush.msra.mxu0 %v1451
    %1625 = vmatpush.msra.mxu0 %v1445
    %1626 = vmatpush.msra.mxu0 %v1439
    %1627 = vmatpush.msra.mxu0 %v1433
    %1628 = vmatpush.msra.mxu0 %v1427
    %1629 = vmatpush.msra.mxu0 %v1421
    %1630 = vmatpush.msra.mxu0 %v1415
    %1631 = vmatpush.msra.mxu0 %v1409
    %1632 = vmatpush.msra.mxu0 %v1403
    %1633 = vmatpush.msra.mxu0 %v1397
    %1634 = vmatpush.msra.mxu0 %v1391
    %1635 = vmatpush.msra.mxu0 %v1385
    %1636 = vmatmul.f32.gmra.mxu0 %v1095
    %v1637 = vpop.f32.mrf.mxu0
    %v1638 = vadd.f32 %v1618, %v1637
    %1639 = vdwg.mxu0
    %1640 = vmatpush.msra.mxu0 %v1188
    %1641 = vmatpush.msra.mxu0 %v1182
    %1642 = vmatpush.msra.mxu0 %v1176
    %1643 = vmatpush.msra.mxu0 %v1170
    %1644 = vmatpush.msra.mxu0 %v1164
    %1645 = vmatpush.msra.mxu0 %v1158
    %1646 = vmatpush.msra.mxu0 %v1152
    %1647 = vmatpush.msra.mxu0 %v1146
    %1648 = vmatpush.msra.mxu0 %v1140
    %1649 = vmatpush.msra.mxu0 %v1134
    %1650 = vmatpush.msra.mxu0 %v1128
    %1651 = vmatpush.msra.mxu0 %v1122
    %1652 = vmatpush.msra.mxu0 %v1116
    %1653 = vmatpush.msra.mxu0 %v1110
    %1654 = vmatpush.msra.mxu0 %v1104
    %1655 = vmatpush.msra.mxu0 %v1098
    %1656 = vmatmul.f32.gmra.mxu0 %v1092
    %v1657 = vpop.f32.mrf.mxu0
    %v1658 = vadd.f32 0.0, %v1657
    %1659 = vdwg.mxu0
    %1660 = vmatpush.msra.mxu0 %v1284
    %1661 = vmatpush.msra.mxu0 %v1278
    %1662 = vmatpush.msra.mxu0 %v1272
    %1663 = vmatpush.msra.mxu0 %v1266
    %1664 = vmatpush.msra.mxu0 %v1260
    %1665 = vmatpush.msra.mxu0 %v1254
    %1666 = vmatpush.msra.mxu0 %v1248
    %1667 = vmatpush.msra.mxu0 %v1242
    %1668 = vmatpush.msra.mxu0 %v1236
    %1669 = vmatpush.msra.mxu0 %v1230
    %1670 = vmatpush.msra.mxu0 %v1224
    %1671 = vmatpush.msra.mxu0 %v1218
    %1672 = vmatpush.msra.mxu0 %v1212
    %1673 = vmatpush.msra.mxu0 %v1206
    %1674 = vmatpush.msra.mxu0 %v1200
    %1675 = vmatpush.msra.mxu0 %v1194
    %1676 = vmatmul.f32.gmra.mxu0 %v1093
    %v1677 = vpop.f32.mrf.mxu0
    %v1678 = vadd.f32 %v1658, %v1677
    %1679 = vdwg.mxu0
    %1680 = vmatpush.msra.mxu0 %v1380
    %1681 = vmatpush.msra.mxu0 %v1374
    %1682 = vmatpush.msra.mxu0 %v1368
    %1683 = vmatpush.msra.mxu0 %v1362
    %1684 = vmatpush.msra.mxu0 %v1356
    %1685 = vmatpush.msra.mxu0 %v1350
    %1686 = vmatpush.msra.mxu0 %v1344
    %1687 = vmatpush.msra.mxu0 %v1338
    %1688 = vmatpush.msra.mxu0 %v1332
    %1689 = vmatpush.msra.mxu0 %v1326
    %1690 = vmatpush.msra.mxu0 %v1320
    %1691 = vmatpush.msra.mxu0 %v1314
    %1692 = vmatpush.msra.mxu0 %v1308
    %1693 = vmatpush.msra.mxu0 %v1302
    %1694 = vmatpush.msra.mxu0 %v1296
    %1695 = vmatpush.msra.mxu0 %v1290
    %1696 = vmatmul.f32.gmra.mxu0 %v1094
    %v1697 = vpop.f32.mrf.mxu0
    %v1698 = vadd.f32 %v1678, %v1697
    %1699 = vdwg.mxu0
    %1700 = vmatpush.msra.mxu0 %v1476
    %1701 = vmatpush.msra.mxu0 %v1470
    %1702 = vmatpush.msra.mxu0 %v1464
    %1703 = vmatpush.msra.mxu0 %v1458
    %1704 = vmatpush.msra.mxu0 %v1452
    %1705 = vmatpush.msra.mxu0 %v1446
    %1706 = vmatpush.msra.mxu0 %v1440
    %1707 = vmatpush.msra.mxu0 %v1434
    %1708 = vmatpush.msra.mxu0 %v1428
    %1709 = vmatpush.msra.mxu0 %v1422
    %1710 = vmatpush.msra.mxu0 %v1416
    %1711 = vmatpush.msra.mxu0 %v1410
    %1712 = vmatpush.msra.mxu0 %v1404
    %1713 = vmatpush.msra.mxu0 %v1398
    %1714 = vmatpush.msra.mxu0 %v1392
    %1715 = vmatpush.msra.mxu0 %v1386
    %1716 = vmatmul.f32.gmra.mxu0 %v1095
    %v1717 = vpop.f32.mrf.mxu0
    %v1718 = vadd.f32 %v1698, %v1717
    %1719 = vdwg.mxu0
    %1720 = vmatpush.msra.mxu0 %v1189
    %1721 = vmatpush.msra.mxu0 %v1183
    %1722 = vmatpush.msra.mxu0 %v1177
    %1723 = vmatpush.msra.mxu0 %v1171
    %1724 = vmatpush.msra.mxu0 %v1165
    %1725 = vmatpush.msra.mxu0 %v1159
    %1726 = vmatpush.msra.mxu0 %v1153
    %1727 = vmatpush.msra.mxu0 %v1147
    %1728 = vmatpush.msra.mxu0 %v1141
    %1729 = vmatpush.msra.mxu0 %v1135
    %1730 = vmatpush.msra.mxu0 %v1129
    %1731 = vmatpush.msra.mxu0 %v1123
    %1732 = vmatpush.msra.mxu0 %v1117
    %1733 = vmatpush.msra.mxu0 %v1111
    %1734 = vmatpush.msra.mxu0 %v1105
    %1735 = vmatpush.msra.mxu0 %v1099
    %1736 = vmatmul.f32.gmra.mxu0 %v1092
    %v1737 = vpop.f32.mrf.mxu0
    %v1738 = vadd.f32 0.0, %v1737
    %1739 = vdwg.mxu0
    %1740 = vmatpush.msra.mxu0 %v1285
    %1741 = vmatpush.msra.mxu0 %v1279
    %1742 = vmatpush.msra.mxu0 %v1273
    %1743 = vmatpush.msra.mxu0 %v1267
    %1744 = vmatpush.msra.mxu0 %v1261
    %1745 = vmatpush.msra.mxu0 %v1255
    %1746 = vmatpush.msra.mxu0 %v1249
    %1747 = vmatpush.msra.mxu0 %v1243
    %1748 = vmatpush.msra.mxu0 %v1237
    %1749 = vmatpush.msra.mxu0 %v1231
    %1750 = vmatpush.msra.mxu0 %v1225
    %1751 = vmatpush.msra.mxu0 %v1219
    %1752 = vmatpush.msra.mxu0 %v1213
    %1753 = vmatpush.msra.mxu0 %v1207
    %1754 = vmatpush.msra.mxu0 %v1201
    %1755 = vmatpush.msra.mxu0 %v1195
    %1756 = vmatmul.f32.gmra.mxu0 %v1093
    %v1757 = vpop.f32.mrf.mxu0
    %v1758 = vadd.f32 %v1738, %v1757
    %1759 = vdwg.mxu0
    %1760 = vmatpush.msra.mxu0 %v1381
    %1761 = vmatpush.msra.mxu0 %v1375
    %1762 = vmatpush.msra.mxu0 %v1369
    %1763 = vmatpush.msra.mxu0 %v1363
    %1764 = vmatpush.msra.mxu0 %v1357
    %1765 = vmatpush.msra.mxu0 %v1351
    %1766 = vmatpush.msra.mxu0 %v1345
    %1767 = vmatpush.msra.mxu0 %v1339
    %1768 = vmatpush.msra.mxu0 %v1333
    %1769 = vmatpush.msra.mxu0 %v1327
    %1770 = vmatpush.msra.mxu0 %v1321
    %1771 = vmatpush.msra.mxu0 %v1315
    %1772 = vmatpush.msra.mxu0 %v1309
    %1773 = vmatpush.msra.mxu0 %v1303
    %1774 = vmatpush.msra.mxu0 %v1297
    %1775 = vmatpush.msra.mxu0 %v1291
    %1776 = vmatmul.f32.gmra.mxu0 %v1094
    %v1777 = vpop.f32.mrf.mxu0
    %v1778 = vadd.f32 %v1758, %v1777
    %1779 = vdwg.mxu0
    %1780 = vmatpush.msra.mxu0 %v1477
    %1781 = vmatpush.msra.mxu0 %v1471
    %1782 = vmatpush.msra.mxu0 %v1465
    %1783 = vmatpush.msra.mxu0 %v1459
    %1784 = vmatpush.msra.mxu0 %v1453
    %1785 = vmatpush.msra.mxu0 %v1447
    %1786 = vmatpush.msra.mxu0 %v1441
    %1787 = vmatpush.msra.mxu0 %v1435
    %1788 = vmatpush.msra.mxu0 %v1429
    %1789 = vmatpush.msra.mxu0 %v1423
    %1790 = vmatpush.msra.mxu0 %v1417
    %1791 = vmatpush.msra.mxu0 %v1411
    %1792 = vmatpush.msra.mxu0 %v1405
    %1793 = vmatpush.msra.mxu0 %v1399
    %1794 = vmatpush.msra.mxu0 %v1393
    %1795 = vmatpush.msra.mxu0 %v1387
    %1796 = vmatmul.f32.gmra.mxu0 %v1095
    %v1797 = vpop.f32.mrf.mxu0
    %v1798 = vadd.f32 %v1778, %v1797
    %1799 = vdwg.mxu0
    %1800 = vmatpush.msra.mxu0 %v1190
    %1801 = vmatpush.msra.mxu0 %v1184
    %1802 = vmatpush.msra.mxu0 %v1178
    %1803 = vmatpush.msra.mxu0 %v1172
    %1804 = vmatpush.msra.mxu0 %v1166
    %1805 = vmatpush.msra.mxu0 %v1160
    %1806 = vmatpush.msra.mxu0 %v1154
    %1807 = vmatpush.msra.mxu0 %v1148
    %1808 = vmatpush.msra.mxu0 %v1142
    %1809 = vmatpush.msra.mxu0 %v1136
    %1810 = vmatpush.msra.mxu0 %v1130
    %1811 = vmatpush.msra.mxu0 %v1124
    %1812 = vmatpush.msra.mxu0 %v1118
    %1813 = vmatpush.msra.mxu0 %v1112
    %1814 = vmatpush.msra.mxu0 %v1106
    %1815 = vmatpush.msra.mxu0 %v1100
    %1816 = vmatmul.f32.gmra.mxu0 %v1092
    %v1817 = vpop.f32.mrf.mxu0
    %v1818 = vadd.f32 0.0, %v1817
    %1819 = vdwg.mxu0
    %1820 = vmatpush.msra.mxu0 %v1286
    %1821 = vmatpush.msra.mxu0 %v1280
    %1822 = vmatpush.msra.mxu0 %v1274
    %1823 = vmatpush.msra.mxu0 %v1268
    %1824 = vmatpush.msra.mxu0 %v1262
    %1825 = vmatpush.msra.mxu0 %v1256
    %1826 = vmatpush.msra.mxu0 %v1250
    %1827 = vmatpush.msra.mxu0 %v1244
    %1828 = vmatpush.msra.mxu0 %v1238
    %1829 = vmatpush.msra.mxu0 %v1232
    %1830 = vmatpush.msra.mxu0 %v1226
    %1831 = vmatpush.msra.mxu0 %v1220
    %1832 = vmatpush.msra.mxu0 %v1214
    %1833 = vmatpush.msra.mxu0 %v1208
    %1834 = vmatpush.msra.mxu0 %v1202
    %1835 = vmatpush.msra.mxu0 %v1196
    %1836 = vmatmul.f32.gmra.mxu0 %v1093
    %v1837 = vpop.f32.mrf.mxu0
    %v1838 = vadd.f32 %v1818, %v1837
    %1839 = vdwg.mxu0
    %1840 = vmatpush.msra.mxu0 %v1382
    %1841 = vmatpush.msra.mxu0 %v1376
    %1842 = vmatpush.msra.mxu0 %v1370
    %1843 = vmatpush.msra.mxu0 %v1364
    %1844 = vmatpush.msra.mxu0 %v1358
    %1845 = vmatpush.msra.mxu0 %v1352
    %1846 = vmatpush.msra.mxu0 %v1346
    %1847 = vmatpush.msra.mxu0 %v1340
    %1848 = vmatpush.msra.mxu0 %v1334
    %1849 = vmatpush.msra.mxu0 %v1328
    %1850 = vmatpush.msra.mxu0 %v1322
    %1851 = vmatpush.msra.mxu0 %v1316
    %1852 = vmatpush.msra.mxu0 %v1310
    %1853 = vmatpush.msra.mxu0 %v1304
    %1854 = vmatpush.msra.mxu0 %v1298
    %1855 = vmatpush.msra.mxu0 %v1292
    %1856 = vmatmul.f32.gmra.mxu0 %v1094
    %v1857 = vpop.f32.mrf.mxu0
    %v1858 = vadd.f32 %v1838, %v1857
    %1859 = vdwg.mxu0
    %1860 = vmatpush.msra.mxu0 %v1478
    %1861 = vmatpush.msra.mxu0 %v1472
    %1862 = vmatpush.msra.mxu0 %v1466
    %1863 = vmatpush.msra.mxu0 %v1460
    %1864 = vmatpush.msra.mxu0 %v1454
    %1865 = vmatpush.msra.mxu0 %v1448
    %1866 = vmatpush.msra.mxu0 %v1442
    %1867 = vmatpush.msra.mxu0 %v1436
    %1868 = vmatpush.msra.mxu0 %v1430
    %1869 = vmatpush.msra.mxu0 %v1424
    %1870 = vmatpush.msra.mxu0 %v1418
    %1871 = vmatpush.msra.mxu0 %v1412
    %1872 = vmatpush.msra.mxu0 %v1406
    %1873 = vmatpush.msra.mxu0 %v1400
    %1874 = vmatpush.msra.mxu0 %v1394
    %1875 = vmatpush.msra.mxu0 %v1388
    %1876 = vmatmul.f32.gmra.mxu0 %v1095
    %v1877 = vpop.f32.mrf.mxu0
    %v1878 = vadd.f32 %v1858, %v1877
    %1879 = vdwg.mxu0
    %1880 = vmatpush.msra.mxu0 %v1191
    %1881 = vmatpush.msra.mxu0 %v1185
    %1882 = vmatpush.msra.mxu0 %v1179
    %1883 = vmatpush.msra.mxu0 %v1173
    %1884 = vmatpush.msra.mxu0 %v1167
    %1885 = vmatpush.msra.mxu0 %v1161
    %1886 = vmatpush.msra.mxu0 %v1155
    %1887 = vmatpush.msra.mxu0 %v1149
    %1888 = vmatpush.msra.mxu0 %v1143
    %1889 = vmatpush.msra.mxu0 %v1137
    %1890 = vmatpush.msra.mxu0 %v1131
    %1891 = vmatpush.msra.mxu0 %v1125
    %1892 = vmatpush.msra.mxu0 %v1119
    %1893 = vmatpush.msra.mxu0 %v1113
    %1894 = vmatpush.msra.mxu0 %v1107
    %1895 = vmatpush.msra.mxu0 %v1101
    %1896 = vmatmul.f32.gmra.mxu0 %v1092
    %v1897 = vpop.f32.mrf.mxu0
    %v1898 = vadd.f32 0.0, %v1897
    %1899 = vdwg.mxu0
    %1900 = vmatpush.msra.mxu0 %v1287
    %1901 = vmatpush.msra.mxu0 %v1281
    %1902 = vmatpush.msra.mxu0 %v1275
    %1903 = vmatpush.msra.mxu0 %v1269
    %1904 = vmatpush.msra.mxu0 %v1263
    %1905 = vmatpush.msra.mxu0 %v1257
    %1906 = vmatpush.msra.mxu0 %v1251
    %1907 = vmatpush.msra.mxu0 %v1245
    %1908 = vmatpush.msra.mxu0 %v1239
    %1909 = vmatpush.msra.mxu0 %v1233
    %1910 = vmatpush.msra.mxu0 %v1227
    %1911 = vmatpush.msra.mxu0 %v1221
    %1912 = vmatpush.msra.mxu0 %v1215
    %1913 = vmatpush.msra.mxu0 %v1209
    %1914 = vmatpush.msra.mxu0 %v1203
    %1915 = vmatpush.msra.mxu0 %v1197
    %1916 = vmatmul.f32.gmra.mxu0 %v1093
    %v1917 = vpop.f32.mrf.mxu0
    %v1918 = vadd.f32 %v1898, %v1917
    %1919 = vdwg.mxu0
    %1920 = vmatpush.msra.mxu0 %v1383
    %1921 = vmatpush.msra.mxu0 %v1377
    %1922 = vmatpush.msra.mxu0 %v1371
    %1923 = vmatpush.msra.mxu0 %v1365
    %1924 = vmatpush.msra.mxu0 %v1359
    %1925 = vmatpush.msra.mxu0 %v1353
    %1926 = vmatpush.msra.mxu0 %v1347
    %1927 = vmatpush.msra.mxu0 %v1341
    %1928 = vmatpush.msra.mxu0 %v1335
    %1929 = vmatpush.msra.mxu0 %v1329
    %1930 = vmatpush.msra.mxu0 %v1323
    %1931 = vmatpush.msra.mxu0 %v1317
    %1932 = vmatpush.msra.mxu0 %v1311
    %1933 = vmatpush.msra.mxu0 %v1305
    %1934 = vmatpush.msra.mxu0 %v1299
    %1935 = vmatpush.msra.mxu0 %v1293
    %1936 = vmatmul.f32.gmra.mxu0 %v1094
    %v1937 = vpop.f32.mrf.mxu0
    %v1938 = vadd.f32 %v1918, %v1937
    %1939 = vdwg.mxu0
    %1940 = vmatpush.msra.mxu0 %v1479
    %1941 = vmatpush.msra.mxu0 %v1473
    %1942 = vmatpush.msra.mxu0 %v1467
    %1943 = vmatpush.msra.mxu0 %v1461
    %1944 = vmatpush.msra.mxu0 %v1455
    %1945 = vmatpush.msra.mxu0 %v1449
    %1946 = vmatpush.msra.mxu0 %v1443
    %1947 = vmatpush.msra.mxu0 %v1437
    %1948 = vmatpush.msra.mxu0 %v1431
    %1949 = vmatpush.msra.mxu0 %v1425
    %1950 = vmatpush.msra.mxu0 %v1419
    %1951 = vmatpush.msra.mxu0 %v1413
    %1952 = vmatpush.msra.mxu0 %v1407
    %1953 = vmatpush.msra.mxu0 %v1401
    %1954 = vmatpush.msra.mxu0 %v1395
    %1955 = vmatpush.msra.mxu0 %v1389
    %1956 = vmatmul.f32.gmra.mxu0 %v1095
    %v1957 = vpop.f32.mrf.mxu0
    %v1958 = vadd.f32 %v1938, %v1957
    %1959 = vdwg.mxu0
    %v1960 = vtanh.pop %v1558
    %v1961 = vtanh.pop %v1638
    %v1962 = vtanh.pop %v1718
    %v1963 = vtanh.pop %v1798
    %v1964 = vtanh.pop %v1878
    %v1965 = vtanh.pop %v1958
    %v1972 = vrot.slane %v1961, 6
    %v1973 = vrot.slane %v1962, 4
    %v1974 = vrot.slane %v1963, 2
    %v1975 = vrot.slane %v1965, 6
    %vm1976 = vcmask 1041408
    %v1977 = vsel %vm1976, %v1960, %v1972
    %vm1978 = vcmask 1045508
    %v1979 = vsel %vm1978, %v1973, %v1974
    %vm1980 = vcmask 1043456
    %v1981 = vsel %vm1980, %v1977, %v1979
    %v1982 = vsel %vm1976, %v1964, %v1975
    %1985 = vst [vmem:[%s14] sm:$0xff] %v1981
    %1986 = vst [vmem:[%s14 + $0x8] sm:$0xf] %v1982
    // Predicated region
    $region102: #{generator_forward.1} parent=1 // pred_check
      _
    $region103: #{generator_forward.1} parent=1 // pred_check_branch
      %1988 = sbr.rel (0) target = $region105
    $region104: #{generator_forward.1} parent=1 // pred_region
      _
    $region105: #{generator_forward.1} parent=1 // pred_fallthru
      _
    // Predicated region
    $region106: #{generator_forward.1} parent=1 // pred_check
      _
    $region107: #{generator_forward.1} parent=1 // pred_check_branch
      %1990 = sbr.rel (0) target = $region109
    $region108: #{generator_forward.1} parent=1 // pred_region
      _
    $region109: #{generator_forward.1} parent=1 // pred_fallthru
      _
    %1991 = vsyncpa [#allocation3], 1
    %1992 = vsyncpa [#allocation5], 1
    %1993 = vsyncpa [#allocation8], 1
    %1994 = vsyncpa [#allocation11], 1
    %1995 = vsyncpa [#allocation14], 1
    %1996 = vsyncpa [#allocation17], 1

</llo_original>
